<compile_context>
chip_gen: v7x
topology: tpu7x:2x2x1
jax: 0.10.0
libtpu: 0.0.40
codegen_flags: <defaults>
</compile_context>

<pallas_src>
import functools
import math

import jax
import jax.numpy as jnp
from jax.experimental import pallas as pl
from jax.experimental.pallas import tpu as pltpu

EPS = 1e-5  # nn.LayerNorm default


def _layernorm(x, gamma, beta):
    mean = jnp.mean(x, axis=-1, keepdims=True)
    var = jnp.mean((x - mean) ** 2, axis=-1, keepdims=True)
    return (x - mean) * jax.lax.rsqrt(var + EPS) * gamma + beta


def _probe_pipeline_mode():
    """True iff this JAX supports pl.BlockSpec(..., pipeline_mode=pl.Buffered(k))."""
    try:
        pl.BlockSpec((8, 128), lambda i: (0, 0), pipeline_mode=pl.Buffered(1))
        return True
    except (TypeError, AttributeError):
        return False


_SUPPORTS_PIPELINE_MODE = _probe_pipeline_mode()


def _round_up(v, m):
    return -(-v // m) * m


def _padded_bytes(shape, dtype):
    """VMEM footprint of one buffer with (sublane, lane) tile padding."""
    dt = jnp.dtype(dtype)
    packing = max(1, 4 // dt.itemsize)
    dims = list(shape) if shape else [1]
    dims[-1] = _round_up(dims[-1], 128)
    if len(dims) >= 2:
        dims[-2] = _round_up(dims[-2], 8 * packing)
    n = 1
    for d in dims:
        n *= d
    return n * dt.itemsize


def _vmem_cap_bytes():
    """Per-core VMEM we are willing to request (leave Mosaic headroom)."""
    cap = 128 * 1024 * 1024
    try:
        cap = int(getattr(pltpu.get_tpu_info(), "vmem_capacity_bytes", cap))
    except Exception:
        pass
    # Never ask for the full physical VMEM (v7x has 64 MiB total per core).
    return max(16 * 1024 * 1024, cap - max(cap // 8, 8 * 1024 * 1024))


def transformer_block_kernel(
    x_ref,                       # (S, E)   full sequence of one batch element
    wqkv_ref, bqkv_ref,          # (E, 3E), (1, 3E)  fused Q/K/V projection
    wo_ref, bo_ref,              # (E, E), (1, E)
    g1_ref, be1_ref,             # LayerNorm1 weight / bias
    g2_ref, be2_ref,             # LayerNorm2 weight / bias
    w1_ref, bf1_ref,             # (E, F), (1, F)
    w2_ref, bf2_ref,             # (F, E), (1, E)
    o_ref,                       # (tq, E) output tile
    q_scr, k_scr, v_scr,         # (H, S, hd) persistent VMEM scratch (compute dtype)
    attn_scr,                    # (tq, E) f32 scratch for head re-assembly
    *, n_heads, tq, qkv_chunk, compute_dtype, approx_recip,
):
    S, E = x_ref.shape
    hd = E // n_heads
    scale = 1.0 / math.sqrt(hd)
    qi = pl.program_id(1)

    # ---- once per batch element (query tile 0): chunked LN1 + fused QKV
    #      projection over S; heads split into persistent VMEM scratch.
    #      Live value bounded to (qkv_chunk, 3E); head-split stores interleave
    #      with the next chunk's MXU work. ----
    @pl.when(qi == 0)
    def _():
        n_chunks = S // qkv_chunk

        def chunk_body(c, carry):
            cs = pl.multiple_of(c * qkv_chunk, qkv_chunk)
            x_c = x_ref[pl.ds(cs, qkv_chunk), :].astype(jnp.float32)
            x2_c = _layernorm(x_c, g1_ref[...], be1_ref[...])
            qkv_c = (
                jnp.dot(x2_c.astype(compute_dtype), wqkv_ref[...],
                        preferred_element_type=jnp.float32)
                + bqkv_ref[...]
            )  # (chunk, 3E) f32
            # Fold the softmax scale into Q once (saves a per-tile VPU pass
            # over the (H, tq, S) score tensor).
            q_c = (qkv_c[:, :E] * scale).astype(q_scr.dtype)
            k_c = qkv_c[:, E:2 * E].astype(k_scr.dtype)
            v_c = qkv_c[:, 2 * E:].astype(v_scr.dtype)
            for h in range(n_heads):
                q_scr[h, pl.ds(cs, qkv_chunk), :] = q_c[:, h * hd:(h + 1) * hd]
                k_scr[h, pl.ds(cs, qkv_chunk), :] = k_c[:, h * hd:(h + 1) * hd]
                v_scr[h, pl.ds(cs, qkv_chunk), :] = v_c[:, h * hd:(h + 1) * hd]
            return carry

        jax.lax.fori_loop(0, n_chunks, chunk_body, 0)

    # ---- per query tile: head-batched attention + output proj + FFN. ----
    qs = pl.multiple_of(qi * tq, tq)
    x_t = x_ref[pl.ds(qs, tq), :].astype(jnp.float32)            # (tq, E) residual

    q_t = q_scr[:, pl.ds(qs, tq), :]                             # (H, tq, hd) pre-scaled
    k_all = k_scr[...]                                           # (H, S, hd)
    v_all = v_scr[...]                                           # (H, S, hd)

    s = jnp.einsum("hqd,hkd->hqk", q_t, k_all,
                   preferred_element_type=jnp.float32)           # (H, tq, S) f32
    s = s - jnp.max(s, axis=-1, keepdims=True)
    p = jnp.exp(s)
    p = p * pl.reciprocal(jnp.sum(p, axis=-1, keepdims=True), approx=approx_recip)
    ctx = jnp.einsum("hqk,hkd->hqd", p.astype(compute_dtype), v_all,
                     preferred_element_type=jnp.float32)         # (H, tq, hd) f32

    # Re-assemble heads into a lane-contiguous (tq, E) slab via VMEM scratch;
    # keeps the Wo matmul full-width (K=E) on the MXU.
    for h in range(n_heads):
        attn_scr[:, h * hd:(h + 1) * hd] = ctx[h]
    attn = (
        jnp.dot(attn_scr[...].astype(compute_dtype), wo_ref[...],
                preferred_element_type=jnp.float32)
        + bo_ref[...]
    )

    x1 = x_t + attn

    x2 = _layernorm(x1, g2_ref[...], be2_ref[...])
    h1 = (
        jnp.dot(x2.astype(compute_dtype), w1_ref[...],
                preferred_element_type=jnp.float32)
        + bf1_ref[...]
    )
    h1 = jnp.maximum(h1, 0.0)
    ff = (
        jnp.dot(h1.astype(compute_dtype), w2_ref[...],
                preferred_element_type=jnp.float32)
        + bf2_ref[...]
    )
    o_ref[...] = (x1 + ff).astype(o_ref.dtype)


def _build_call(B, S, E, F, n_heads, tq, qkv_chunk, compute_dtype, x_dtype,
                single_buffer):
    hd = E // n_heads
    nq = S // tq
    cdt = jnp.dtype(compute_dtype)
    f32 = jnp.float32

    # Weights never change across the grid -> single-buffer them when supported.
    w_mode = dict(pipeline_mode=pl.Buffered(1)) if single_buffer else {}

    def w_spec(shape):
        return pl.BlockSpec(shape, lambda b, qi: (0,) * len(shape), **w_mode)

    # x's block index only changes with b; single-buffer it when the slab is
    # large (the exposed re-fetch per batch element is tiny vs nq tiles of work).
    single_buffer_x = single_buffer and _padded_bytes((S, E), x_dtype) > (4 << 20)
    x_mode = dict(pipeline_mode=pl.Buffered(1)) if single_buffer_x else {}

    # ---- padding-aware VMEM budget ----
    w_bufs = 1 if single_buffer else 2
    x_bufs = 1 if single_buffer_x else 2
    weight_bytes = w_bufs * (
        _padded_bytes((E, 3 * E), cdt) + _padded_bytes((1, 3 * E), f32)
        + _padded_bytes((E, E), cdt) + _padded_bytes((1, E), f32)
        + 4 * _padded_bytes((1, E), f32)
        + _padded_bytes((E, F), cdt) + _padded_bytes((1, F), f32)
        + _padded_bytes((F, E), cdt) + _padded_bytes((1, E), f32)
    )
    scratch_bytes = (
        3 * n_heads * _padded_bytes((S, hd), cdt)    # Q/K/V planes (lane-padded!)
        + _padded_bytes((tq, E), f32)                # head re-assembly
    )
    io_bytes = (x_bufs * _padded_bytes((S, E), x_dtype)
                + 2 * _padded_bytes((tq, E), x_dtype))
    transient_bytes = (
        2 * _padded_bytes((qkv_chunk, E), f32)           # x chunk + LN1 chunk
        + 2 * _padded_bytes((qkv_chunk, 3 * E), f32)     # qkv chunk (+ head slices)
        + 2 * n_heads * _padded_bytes((tq, S), f32)      # scores s and p
        + n_heads * _padded_bytes((tq, hd), f32)         # ctx
        + 4 * _padded_bytes((tq, E), f32)                # x_t, attn, x1, x2
        + 2 * _padded_bytes((tq, F), f32)                # h1 (+ relu)
    )
    vmem_limit = int(min(
        _vmem_cap_bytes(),
        max(32 * 1024 * 1024,
            (weight_bytes + scratch_bytes + io_bytes) * 5 // 4
            + transient_bytes * 3 // 2),
    ))

    kernel = functools.partial(
        transformer_block_kernel,
        n_heads=n_heads, tq=tq, qkv_chunk=qkv_chunk, compute_dtype=cdt,
        approx_recip=(cdt.itemsize < 4))

    return pl.pallas_call(
        kernel,
        out_shape=jax.ShapeDtypeStruct((B, S, E), x_dtype),
        grid_spec=pltpu.PrefetchScalarGridSpec(
            num_scalar_prefetch=0,
            grid=(B, nq),
            in_specs=[
                pl.BlockSpec((None, S, E), lambda b, qi: (b, 0, 0), **x_mode),  # x
                w_spec((E, 3 * E)),   # wqkv (fused, pre-transposed)
                w_spec((1, 3 * E)),   # bqkv
                w_spec((E, E)),       # wo
                w_spec((1, E)),       # bo
                w_spec((1, E)),       # gamma1
                w_spec((1, E)),       # beta1
                w_spec((1, E)),       # gamma2
                w_spec((1, E)),       # beta2
                w_spec((E, F)),       # w1
                w_spec((1, F)),       # b1
                w_spec((F, E)),       # w2
                w_spec((1, E)),       # b2
            ],
            out_specs=pl.BlockSpec((None, tq, E), lambda b, qi: (b, qi, 0)),
            scratch_shapes=[
                pltpu.VMEM((n_heads, S, hd), cdt),   # Q (pre-scaled, compute dtype)
                pltpu.VMEM((n_heads, S, hd), cdt),   # K
                pltpu.VMEM((n_heads, S, hd), cdt),   # V
                pltpu.VMEM((tq, E), jnp.float32),    # head re-assembly
            ],
        ),
        compiler_params=pltpu.CompilerParams(
            dimension_semantics=("parallel", "arbitrary"),
            vmem_limit_bytes=vmem_limit,
        ),
    )


def transformer_block(x, params, n_heads, *, tq=None, qkv_chunk=None,
                      compute_dtype=jnp.bfloat16):
    B, S, E = x.shape
    F = params["w1"].shape[1]
    assert E % n_heads == 0
    cdt = jnp.dtype(compute_dtype)
    # Sublane alignment required for dynamic slicing of the packed scratch.
    sub = 8 * max(1, 4 // cdt.itemsize)

    if tq is None:
        # TODO(synk): tq=256 is often better on v6e (128 MiB VMEM); keep 128 on
        #             v5e/v7x — the (H, tq, S) score temporaries scale with tq.
        tq = 128 if S % 128 == 0 else S
    assert S % tq == 0
    assert tq % sub == 0 or tq == S, "query tile must be sublane-aligned"

    if qkv_chunk is None:
        qkv_chunk = S
        for cand in (512, 256, 128, 64, 32, 16):
            if cand <= S and S % cand == 0 and cand % sub == 0:
                qkv_chunk = cand
                break
    assert S % qkv_chunk == 0
    assert qkv_chunk % sub == 0 or qkv_chunk == S, "qkv chunk must be sublane-aligned"

    args = (
        x,
        params["wqkv"].astype(cdt), params["bqkv"],
        params["wo"].astype(cdt), params["bo"],
        params["gamma1"], params["beta1"], params["gamma2"], params["beta2"],
        params["w1"].astype(cdt), params["b1"],
        params["w2"].astype(cdt), params["b2"],
    )
    call = _build_call(B, S, E, F, n_heads, tq, qkv_chunk, cdt, x.dtype,
                       single_buffer=_SUPPORTS_PIPELINE_MODE)
    return call(*args)


def reference_block(x, params, n_heads):
    """Pure-JAX (f32) reference of the same math for a sanity check."""
    B, S, E = x.shape
    hd = E // n_heads
    scale = 1.0 / math.sqrt(hd)

    x2 = _layernorm(x, params["gamma1"], params["beta1"])
    qkv = x2 @ params["wqkv"] + params["bqkv"]
    q, k, v = qkv[..., :E], qkv[..., E:2 * E], qkv[..., 2 * E:]
    q = q.reshape(B, S, n_heads, hd).transpose(0, 2, 1, 3)
    k = k.reshape(B, S, n_heads, hd).transpose(0, 2, 1, 3)
    v = v.reshape(B, S, n_heads, hd).transpose(0, 2, 1, 3)
    s = jnp.einsum("bhqd,bhkd->bhqk", q, k) * scale
    p = jax.nn.softmax(s, axis=-1)
    a = jnp.einsum("bhqk,bhkd->bhqd", p, v).transpose(0, 2, 1, 3).reshape(B, S, E)
    a = a @ params["wo"] + params["bo"]
    x = x + a
    x2 = _layernorm(x, params["gamma2"], params["beta2"])
    h1 = jax.nn.relu(x2 @ params["w1"] + params["b1"])
    return x + h1 @ params["w2"] + params["b2"]


def init_params(key, embedding_dim, n_heads, ff_dim):
    E, F = embedding_dim, ff_dim
    ks = jax.random.split(key, 7)
    std = 0.02
    return {
        # Fused Q/K/V projection (stored transposed: applied as x @ W).
        "wqkv": jax.random.normal(ks[0], (E, 3 * E), jnp.float32) * std,
        "bqkv": jax.random.normal(ks[1], (1, 3 * E), jnp.float32) * std,
        "wo": jax.random.normal(ks[2], (E, E), jnp.float32) * std,
        "bo": jax.random.normal(ks[3], (1, E), jnp.float32) * std,
        # LayerNorms (PyTorch init: weight=1, bias=0).
        "gamma1": jnp.ones((1, E), jnp.float32),
        "beta1": jnp.zeros((1, E), jnp.float32),
        "gamma2": jnp.ones((1, E), jnp.float32),
        "beta2": jnp.zeros((1, E), jnp.float32),
        # Feed-forward (stored transposed).
        "w1": jax.random.normal(ks[4], (E, F), jnp.float32) * std,
        "b1": jax.random.normal(ks[5], (1, F), jnp.float32) * std,
        "w2": jax.random.normal(ks[6], (F, E), jnp.float32) * std,
        "b2": jnp.zeros((1, E), jnp.float32),
    }


if __name__ == "__main__":
    B, S, E, H, FF = 2, 32, 32, 4, 64
    key = jax.random.PRNGKey(0)
    kx, kp = jax.random.split(key)
    x = jax.random.normal(kx, (B, S, E), jnp.float32)
    params = init_params(kp, E, H, FF)

    ref = reference_block(x, params, n_heads=H)

    # f32 compute path (exercises the query-tiled grid: 2 tiles of tq=16 and
    # the chunked LN1+QKV loop: 2 chunks of 16). Exact reciprocal on f32.
    out_f32 = transformer_block(x, params, n_heads=H, tq=16, qkv_chunk=16,
                                compute_dtype=jnp.float32)
    out_f32 = jax.block_until_ready(out_f32)
    assert out_f32.shape == (B, S, E)
    assert jnp.allclose(out_f32, ref, atol=2e-3, rtol=2e-3)

    # bf16 MXU path (f32 accumulate) — the performance configuration.
    out_bf16 = transformer_block(x, params, n_heads=H, tq=16, qkv_chunk=16,
                                 compute_dtype=jnp.bfloat16)
    out_bf16 = jax.block_until_ready(out_bf16)
    assert out_bf16.shape == (B, S, E)
    assert jnp.allclose(out_bf16, ref, atol=2e-2, rtol=2e-2)

    print("KERNEL_OK")
</pallas_src>

<mosaic_0001>
module attributes {stable_mosaic.version = 11 : i64} {
  func.func @transformer_block_kernel(%arg0: i32, %arg1: i32, %arg2: memref<1x32x32xf32, #tpu.memory_space<vmem>>, %arg3: memref<32x96xf32, #tpu.memory_space<vmem>>, %arg4: memref<1x96xf32, #tpu.memory_space<vmem>>, %arg5: memref<32x32xf32, #tpu.memory_space<vmem>>, %arg6: memref<1x32xf32, #tpu.memory_space<vmem>>, %arg7: memref<1x32xf32, #tpu.memory_space<vmem>>, %arg8: memref<1x32xf32, #tpu.memory_space<vmem>>, %arg9: memref<1x32xf32, #tpu.memory_space<vmem>>, %arg10: memref<1x32xf32, #tpu.memory_space<vmem>>, %arg11: memref<32x64xf32, #tpu.memory_space<vmem>>, %arg12: memref<1x64xf32, #tpu.memory_space<vmem>>, %arg13: memref<64x32xf32, #tpu.memory_space<vmem>>, %arg14: memref<1x32xf32, #tpu.memory_space<vmem>>, %arg15: memref<1x16x32xf32, #tpu.memory_space<vmem>>, %arg16: memref<4x32x8xf32, #tpu.memory_space<vmem>>, %arg17: memref<4x32x8xf32, #tpu.memory_space<vmem>>, %arg18: memref<4x32x8xf32, #tpu.memory_space<vmem>>, %arg19: memref<16x32xf32, #tpu.memory_space<vmem>>) attributes {dimension_semantics = [#tpu.dimension_semantics<parallel>, #tpu.dimension_semantics<arbitrary>], iteration_bounds = array<i64: 2, 2>, scalar_prefetch = 0 : i64, scratch_operands = 4 : i64, tpu.core_type = #tpu.core_type<tc>, window_params = [{transform_indices = @transform_0, window_bounds = array<i64: 1, 32, 32>}, {pipeline_mode = #tpu.pipeline_mode<synchronous>, transform_indices = @transform_1, window_bounds = array<i64: 32, 96>}, {pipeline_mode = #tpu.pipeline_mode<synchronous>, transform_indices = @transform_2, window_bounds = array<i64: 1, 96>}, {pipeline_mode = #tpu.pipeline_mode<synchronous>, transform_indices = @transform_3, window_bounds = array<i64: 32, 32>}, {pipeline_mode = #tpu.pipeline_mode<synchronous>, transform_indices = @transform_4, window_bounds = array<i64: 1, 32>}, {pipeline_mode = #tpu.pipeline_mode<synchronous>, transform_indices = @transform_5, window_bounds = array<i64: 1, 32>}, {pipeline_mode = #tpu.pipeline_mode<synchronous>, transform_indices = @transform_6, window_bounds = array<i64: 1, 32>}, {pipeline_mode = #tpu.pipeline_mode<synchronous>, transform_indices = @transform_7, window_bounds = array<i64: 1, 32>}, {pipeline_mode = #tpu.pipeline_mode<synchronous>, transform_indices = @transform_8, window_bounds = array<i64: 1, 32>}, {pipeline_mode = #tpu.pipeline_mode<synchronous>, transform_indices = @transform_9, window_bounds = array<i64: 32, 64>}, {pipeline_mode = #tpu.pipeline_mode<synchronous>, transform_indices = @transform_10, window_bounds = array<i64: 1, 64>}, {pipeline_mode = #tpu.pipeline_mode<synchronous>, transform_indices = @transform_11, window_bounds = array<i64: 64, 32>}, {pipeline_mode = #tpu.pipeline_mode<synchronous>, transform_indices = @transform_12, window_bounds = array<i64: 1, 32>}, {transform_indices = @transform_13, window_bounds = array<i64: 1, 16, 32>}]} {
    %c0_i32 = arith.constant 0 : i32
    %0 = arith.cmpi eq, %arg1, %c0_i32 : i32
    %1 = arith.extui %0 : i1 to i32
    %c0_i32_0 = arith.constant 0 : i32
    %2 = arith.cmpi ne, %1, %c0_i32_0 : i32
    scf.if %2 {
      %c0_i32_48 = arith.constant 0 : i32
      %c2_i32 = arith.constant 2 : i32
      %83 = arith.addi %c0_i32_48, %c2_i32 : i32
      %c1_i32 = arith.constant 1 : i32
      scf.for %arg20 = %c0_i32_48 to %83 step %c1_i32  : i32 {
        %c16_i32_50 = arith.constant 16 : i32
        %84 = arith.muli %arg20, %c16_i32_50 : i32
        %85 = tpu.assume_multiple %84, 16 : i32
        %c0_51 = arith.constant 0 : index
        %86 = arith.index_cast %85 : i32 to index
        %c0_52 = arith.constant 0 : index
        %87 = vector.load %arg2[%c0_51, %86, %c0_52] : memref<1x32x32xf32, #tpu.memory_space<vmem>>, vector<1x16x32xf32>
        %88 = vector.shape_cast %87 : vector<1x16x32xf32> to vector<16x32xf32>
        %c0_53 = arith.constant 0 : index
        %c0_54 = arith.constant 0 : index
        %89 = vector.load %arg7[%c0_53, %c0_54] : memref<1x32xf32, #tpu.memory_space<vmem>>, vector<1x32xf32>
        %c0_55 = arith.constant 0 : index
        %c0_56 = arith.constant 0 : index
        %90 = vector.load %arg8[%c0_55, %c0_56] : memref<1x32xf32, #tpu.memory_space<vmem>>, vector<1x32xf32>
        %cst_57 = arith.constant dense<0.000000e+00> : vector<16xf32>
        %91 = vector.multi_reduction <add>, %88, %cst_57 [1] : vector<16x32xf32> to vector<16xf32>
        %92 = vector.shape_cast %91 : vector<16xf32> to vector<16x1xf32>
        %cst_58 = arith.constant 3.200000e+01 : f32
        %93 = vector.broadcast %cst_58 : f32 to vector<16x1xf32>
        %94 = arith.divf %92, %93 : vector<16x1xf32>
        %95 = vector.broadcast %94 : vector<16x1xf32> to vector<16x32xf32>
        %96 = arith.subf %88, %95 : vector<16x32xf32>
        %97 = arith.mulf %96, %96 : vector<16x32xf32>
        %cst_59 = arith.constant dense<0.000000e+00> : vector<16xf32>
        %98 = vector.multi_reduction <add>, %97, %cst_59 [1] : vector<16x32xf32> to vector<16xf32>
        %99 = vector.shape_cast %98 : vector<16xf32> to vector<16x1xf32>
        %cst_60 = arith.constant 3.200000e+01 : f32
        %100 = vector.broadcast %cst_60 : f32 to vector<16x1xf32>
        %101 = arith.divf %99, %100 : vector<16x1xf32>
        %102 = vector.broadcast %94 : vector<16x1xf32> to vector<16x32xf32>
        %103 = arith.subf %88, %102 : vector<16x32xf32>
        %cst_61 = arith.constant 9.99999974E-6 : f32
        %104 = vector.broadcast %cst_61 : f32 to vector<16x1xf32>
        %105 = arith.addf %101, %104 : vector<16x1xf32>
        %106 = math.rsqrt %105 : vector<16x1xf32>
        %107 = vector.broadcast %106 : vector<16x1xf32> to vector<16x32xf32>
        %108 = arith.mulf %103, %107 : vector<16x32xf32>
        %109 = vector.broadcast %89 : vector<1x32xf32> to vector<16x32xf32>
        %110 = arith.mulf %108, %109 : vector<16x32xf32>
        %111 = vector.broadcast %90 : vector<1x32xf32> to vector<16x32xf32>
        %112 = arith.addf %110, %111 : vector<16x32xf32>
        %c0_62 = arith.constant 0 : index
        %c0_63 = arith.constant 0 : index
        %113 = vector.load %arg3[%c0_62, %c0_63] : memref<32x96xf32, #tpu.memory_space<vmem>>, vector<32x96xf32>
        %cst_64 = arith.constant dense<0.000000e+00> : vector<16x96xf32>
        %114 = tpu.matmul %112, %113, %cst_64 {dimension_numbers = #tpu.dot_dimension_numbers<[1], [0], [0], [1], [0, 0, 1, 1], [], []>} : vector<16x32xf32>, vector<32x96xf32>, vector<16x96xf32> -> vector<16x96xf32>
        %c0_65 = arith.constant 0 : index
        %c0_66 = arith.constant 0 : index
        %115 = vector.load %arg4[%c0_65, %c0_66] : memref<1x96xf32, #tpu.memory_space<vmem>>, vector<1x96xf32>
        %116 = vector.broadcast %115 : vector<1x96xf32> to vector<16x96xf32>
        %117 = arith.addf %114, %116 : vector<16x96xf32>
        %118 = vector.extract_strided_slice %117 {offsets = [0, 0], sizes = [16, 32], strides = [1, 1]} : vector<16x96xf32> to vector<16x32xf32>
        %cst_67 = arith.constant 0.353553385 : f32
        %119 = vector.broadcast %cst_67 : f32 to vector<16x32xf32>
        %120 = arith.mulf %118, %119 : vector<16x32xf32>
        %121 = vector.extract_strided_slice %117 {offsets = [0, 32], sizes = [16, 32], strides = [1, 1]} : vector<16x96xf32> to vector<16x32xf32>
        %122 = vector.extract_strided_slice %117 {offsets = [0, 64], sizes = [16, 32], strides = [1, 1]} : vector<16x96xf32> to vector<16x32xf32>
        %123 = vector.extract_strided_slice %120 {offsets = [0, 0], sizes = [16, 8], strides = [1, 1]} : vector<16x32xf32> to vector<16x8xf32>
        %c0_68 = arith.constant 0 : index
        %124 = arith.index_cast %85 : i32 to index
        %c0_69 = arith.constant 0 : index
        %125 = vector.load %arg16[%c0_68, %124, %c0_69] : memref<4x32x8xf32, #tpu.memory_space<vmem>>, vector<1x16x8xf32>
        %126 = vector.shape_cast %125 : vector<1x16x8xf32> to vector<16x8xf32>
        %127 = vector.shape_cast %123 : vector<16x8xf32> to vector<1x16x8xf32>
        tpu.vector_store %arg16[%c0_68, %124, %c0_69], %127 {strides = array<i32>} : memref<4x32x8xf32, #tpu.memory_space<vmem>>, vector<1x16x8xf32>,
        %128 = vector.extract_strided_slice %121 {offsets = [0, 0], sizes = [16, 8], strides = [1, 1]} : vector<16x32xf32> to vector<16x8xf32>
        %c0_70 = arith.constant 0 : index
        %129 = arith.index_cast %85 : i32 to index
        %c0_71 = arith.constant 0 : index
        %130 = vector.load %arg17[%c0_70, %129, %c0_71] : memref<4x32x8xf32, #tpu.memory_space<vmem>>, vector<1x16x8xf32>
        %131 = vector.shape_cast %130 : vector<1x16x8xf32> to vector<16x8xf32>
        %132 = vector.shape_cast %128 : vector<16x8xf32> to vector<1x16x8xf32>
        tpu.vector_store %arg17[%c0_70, %129, %c0_71], %132 {strides = array<i32>} : memref<4x32x8xf32, #tpu.memory_space<vmem>>, vector<1x16x8xf32>,
        %133 = vector.extract_strided_slice %122 {offsets = [0, 0], sizes = [16, 8], strides = [1, 1]} : vector<16x32xf32> to vector<16x8xf32>
        %c0_72 = arith.constant 0 : index
        %134 = arith.index_cast %85 : i32 to index
        %c0_73 = arith.constant 0 : index
        %135 = vector.load %arg18[%c0_72, %134, %c0_73] : memref<4x32x8xf32, #tpu.memory_space<vmem>>, vector<1x16x8xf32>
        %136 = vector.shape_cast %135 : vector<1x16x8xf32> to vector<16x8xf32>
        %137 = vector.shape_cast %133 : vector<16x8xf32> to vector<1x16x8xf32>
        tpu.vector_store %arg18[%c0_72, %134, %c0_73], %137 {strides = array<i32>} : memref<4x32x8xf32, #tpu.memory_space<vmem>>, vector<1x16x8xf32>,
        %138 = vector.extract_strided_slice %120 {offsets = [0, 8], sizes = [16, 8], strides = [1, 1]} : vector<16x32xf32> to vector<16x8xf32>
        %c1 = arith.constant 1 : index
        %139 = arith.index_cast %85 : i32 to index
        %c0_74 = arith.constant 0 : index
        %140 = vector.load %arg16[%c1, %139, %c0_74] : memref<4x32x8xf32, #tpu.memory_space<vmem>>, vector<1x16x8xf32>
        %141 = vector.shape_cast %140 : vector<1x16x8xf32> to vector<16x8xf32>
        %142 = vector.shape_cast %138 : vector<16x8xf32> to vector<1x16x8xf32>
        tpu.vector_store %arg16[%c1, %139, %c0_74], %142 {strides = array<i32>} : memref<4x32x8xf32, #tpu.memory_space<vmem>>, vector<1x16x8xf32>,
        %143 = vector.extract_strided_slice %121 {offsets = [0, 8], sizes = [16, 8], strides = [1, 1]} : vector<16x32xf32> to vector<16x8xf32>
        %c1_75 = arith.constant 1 : index
        %144 = arith.index_cast %85 : i32 to index
        %c0_76 = arith.constant 0 : index
        %145 = vector.load %arg17[%c1_75, %144, %c0_76] : memref<4x32x8xf32, #tpu.memory_space<vmem>>, vector<1x16x8xf32>
        %146 = vector.shape_cast %145 : vector<1x16x8xf32> to vector<16x8xf32>
        %147 = vector.shape_cast %143 : vector<16x8xf32> to vector<1x16x8xf32>
        tpu.vector_store %arg17[%c1_75, %144, %c0_76], %147 {strides = array<i32>} : memref<4x32x8xf32, #tpu.memory_space<vmem>>, vector<1x16x8xf32>,
        %148 = vector.extract_strided_slice %122 {offsets = [0, 8], sizes = [16, 8], strides = [1, 1]} : vector<16x32xf32> to vector<16x8xf32>
        %c1_77 = arith.constant 1 : index
        %149 = arith.index_cast %85 : i32 to index
        %c0_78 = arith.constant 0 : index
        %150 = vector.load %arg18[%c1_77, %149, %c0_78] : memref<4x32x8xf32, #tpu.memory_space<vmem>>, vector<1x16x8xf32>
        %151 = vector.shape_cast %150 : vector<1x16x8xf32> to vector<16x8xf32>
        %152 = vector.shape_cast %148 : vector<16x8xf32> to vector<1x16x8xf32>
        tpu.vector_store %arg18[%c1_77, %149, %c0_78], %152 {strides = array<i32>} : memref<4x32x8xf32, #tpu.memory_space<vmem>>, vector<1x16x8xf32>,
        %153 = vector.extract_strided_slice %120 {offsets = [0, 16], sizes = [16, 8], strides = [1, 1]} : vector<16x32xf32> to vector<16x8xf32>
        %c2 = arith.constant 2 : index
        %154 = arith.index_cast %85 : i32 to index
        %c0_79 = arith.constant 0 : index
        %155 = vector.load %arg16[%c2, %154, %c0_79] : memref<4x32x8xf32, #tpu.memory_space<vmem>>, vector<1x16x8xf32>
        %156 = vector.shape_cast %155 : vector<1x16x8xf32> to vector<16x8xf32>
        %157 = vector.shape_cast %153 : vector<16x8xf32> to vector<1x16x8xf32>
        tpu.vector_store %arg16[%c2, %154, %c0_79], %157 {strides = array<i32>} : memref<4x32x8xf32, #tpu.memory_space<vmem>>, vector<1x16x8xf32>,
        %158 = vector.extract_strided_slice %121 {offsets = [0, 16], sizes = [16, 8], strides = [1, 1]} : vector<16x32xf32> to vector<16x8xf32>
        %c2_80 = arith.constant 2 : index
        %159 = arith.index_cast %85 : i32 to index
        %c0_81 = arith.constant 0 : index
        %160 = vector.load %arg17[%c2_80, %159, %c0_81] : memref<4x32x8xf32, #tpu.memory_space<vmem>>, vector<1x16x8xf32>
        %161 = vector.shape_cast %160 : vector<1x16x8xf32> to vector<16x8xf32>
        %162 = vector.shape_cast %158 : vector<16x8xf32> to vector<1x16x8xf32>
        tpu.vector_store %arg17[%c2_80, %159, %c0_81], %162 {strides = array<i32>} : memref<4x32x8xf32, #tpu.memory_space<vmem>>, vector<1x16x8xf32>,
        %163 = vector.extract_strided_slice %122 {offsets = [0, 16], sizes = [16, 8], strides = [1, 1]} : vector<16x32xf32> to vector<16x8xf32>
        %c2_82 = arith.constant 2 : index
        %164 = arith.index_cast %85 : i32 to index
        %c0_83 = arith.constant 0 : index
        %165 = vector.load %arg18[%c2_82, %164, %c0_83] : memref<4x32x8xf32, #tpu.memory_space<vmem>>, vector<1x16x8xf32>
        %166 = vector.shape_cast %165 : vector<1x16x8xf32> to vector<16x8xf32>
        %167 = vector.shape_cast %163 : vector<16x8xf32> to vector<1x16x8xf32>
        tpu.vector_store %arg18[%c2_82, %164, %c0_83], %167 {strides = array<i32>} : memref<4x32x8xf32, #tpu.memory_space<vmem>>, vector<1x16x8xf32>,
        %168 = vector.extract_strided_slice %120 {offsets = [0, 24], sizes = [16, 8], strides = [1, 1]} : vector<16x32xf32> to vector<16x8xf32>
        %c3 = arith.constant 3 : index
        %169 = arith.index_cast %85 : i32 to index
        %c0_84 = arith.constant 0 : index
        %170 = vector.load %arg16[%c3, %169, %c0_84] : memref<4x32x8xf32, #tpu.memory_space<vmem>>, vector<1x16x8xf32>
        %171 = vector.shape_cast %170 : vector<1x16x8xf32> to vector<16x8xf32>
        %172 = vector.shape_cast %168 : vector<16x8xf32> to vector<1x16x8xf32>
        tpu.vector_store %arg16[%c3, %169, %c0_84], %172 {strides = array<i32>} : memref<4x32x8xf32, #tpu.memory_space<vmem>>, vector<1x16x8xf32>,
        %173 = vector.extract_strided_slice %121 {offsets = [0, 24], sizes = [16, 8], strides = [1, 1]} : vector<16x32xf32> to vector<16x8xf32>
        %c3_85 = arith.constant 3 : index
        %174 = arith.index_cast %85 : i32 to index
        %c0_86 = arith.constant 0 : index
        %175 = vector.load %arg17[%c3_85, %174, %c0_86] : memref<4x32x8xf32, #tpu.memory_space<vmem>>, vector<1x16x8xf32>
        %176 = vector.shape_cast %175 : vector<1x16x8xf32> to vector<16x8xf32>
        %177 = vector.shape_cast %173 : vector<16x8xf32> to vector<1x16x8xf32>
        tpu.vector_store %arg17[%c3_85, %174, %c0_86], %177 {strides = array<i32>} : memref<4x32x8xf32, #tpu.memory_space<vmem>>, vector<1x16x8xf32>,
        %178 = vector.extract_strided_slice %122 {offsets = [0, 24], sizes = [16, 8], strides = [1, 1]} : vector<16x32xf32> to vector<16x8xf32>
        %c3_87 = arith.constant 3 : index
        %179 = arith.index_cast %85 : i32 to index
        %c0_88 = arith.constant 0 : index
        %180 = vector.load %arg18[%c3_87, %179, %c0_88] : memref<4x32x8xf32, #tpu.memory_space<vmem>>, vector<1x16x8xf32>
        %181 = vector.shape_cast %180 : vector<1x16x8xf32> to vector<16x8xf32>
        %182 = vector.shape_cast %178 : vector<16x8xf32> to vector<1x16x8xf32>
        tpu.vector_store %arg18[%c3_87, %179, %c0_88], %182 {strides = array<i32>} : memref<4x32x8xf32, #tpu.memory_space<vmem>>, vector<1x16x8xf32>,
      }
      %c2_i32_49 = arith.constant 2 : i32
    } else {
    }
    %c16_i32 = arith.constant 16 : i32
    %3 = arith.muli %arg1, %c16_i32 : i32
    %4 = tpu.assume_multiple %3, 16 : i32
    %c0 = arith.constant 0 : index
    %5 = arith.index_cast %4 : i32 to index
    %c0_1 = arith.constant 0 : index
    %6 = vector.load %arg2[%c0, %5, %c0_1] : memref<1x32x32xf32, #tpu.memory_space<vmem>>, vector<1x16x32xf32>
    %7 = vector.shape_cast %6 : vector<1x16x32xf32> to vector<16x32xf32>
    %c0_2 = arith.constant 0 : index
    %8 = arith.index_cast %4 : i32 to index
    %c0_3 = arith.constant 0 : index
    %9 = vector.load %arg16[%c0_2, %8, %c0_3] : memref<4x32x8xf32, #tpu.memory_space<vmem>>, vector<4x16x8xf32>
    %c0_4 = arith.constant 0 : index
    %c0_5 = arith.constant 0 : index
    %c0_6 = arith.constant 0 : index
    %10 = vector.load %arg17[%c0_4, %c0_5, %c0_6] : memref<4x32x8xf32, #tpu.memory_space<vmem>>, vector<4x32x8xf32>
    %c0_7 = arith.constant 0 : index
    %c0_8 = arith.constant 0 : index
    %c0_9 = arith.constant 0 : index
    %11 = vector.load %arg18[%c0_7, %c0_8, %c0_9] : memref<4x32x8xf32, #tpu.memory_space<vmem>>, vector<4x32x8xf32>
    "tpu.trace_start"() <{level = 10 : i32, message = "hqd,hkd->hqk"}> : () -> ()
    %cst = arith.constant dense<0.000000e+00> : vector<4x16x32xf32>
    %12 = tpu.matmul %9, %10, %cst {dimension_numbers = #tpu.dot_dimension_numbers<[2], [2], [1], [1], [0, 0, 0, 1, 1, 1], [0], [0]>} : vector<4x16x8xf32>, vector<4x32x8xf32>, vector<4x16x32xf32> -> vector<4x16x32xf32>
    "tpu.trace_stop"() : () -> ()
    %cst_10 = arith.constant dense<0xFF800000> : vector<4x16xf32>
    %13 = vector.multi_reduction <maximumf>, %12, %cst_10 [2] : vector<4x16x32xf32> to vector<4x16xf32>
    %14 = vector.shape_cast %13 : vector<4x16xf32> to vector<4x16x1xf32>
    %15 = vector.broadcast %14 : vector<4x16x1xf32> to vector<4x16x32xf32>
    %16 = arith.subf %12, %15 : vector<4x16x32xf32>
    %17 = math.exp %16 : vector<4x16x32xf32>
    %cst_11 = arith.constant dense<0.000000e+00> : vector<4x16xf32>
    %18 = vector.multi_reduction <add>, %17, %cst_11 [2] : vector<4x16x32xf32> to vector<4x16xf32>
    %19 = vector.shape_cast %18 : vector<4x16xf32> to vector<4x16x1xf32>
    %20 = tpu.reciprocal %19 : vector<4x16x1xf32> -> vector<4x16x1xf32>
    %21 = vector.broadcast %20 : vector<4x16x1xf32> to vector<4x16x32xf32>
    %22 = arith.mulf %17, %21 : vector<4x16x32xf32>
    "tpu.trace_start"() <{level = 10 : i32, message = "hqk,hkd->hqd"}> : () -> ()
    %cst_12 = arith.constant dense<0.000000e+00> : vector<4x16x8xf32>
    %23 = tpu.matmul %22, %11, %cst_12 {dimension_numbers = #tpu.dot_dimension_numbers<[2], [1], [1], [2], [0, 0, 0, 1, 1, 2], [0], [0]>} : vector<4x16x32xf32>, vector<4x32x8xf32>, vector<4x16x8xf32> -> vector<4x16x8xf32>
    "tpu.trace_stop"() : () -> ()
    %24 = vector.extract_strided_slice %23 {offsets = [0, 0, 0], sizes = [1, 16, 8], strides = [1, 1, 1]} : vector<4x16x8xf32> to vector<1x16x8xf32>
    %25 = vector.shape_cast %24 : vector<1x16x8xf32> to vector<16x8xf32>
    %c0_13 = arith.constant 0 : index
    %c0_14 = arith.constant 0 : index
    %26 = vector.load %arg19[%c0_13, %c0_14] : memref<16x32xf32, #tpu.memory_space<vmem>>, vector<16x8xf32>
    tpu.vector_store %arg19[%c0_13, %c0_14], %25 {strides = array<i32>} : memref<16x32xf32, #tpu.memory_space<vmem>>, vector<16x8xf32>,
    %27 = vector.extract_strided_slice %23 {offsets = [1, 0, 0], sizes = [1, 16, 8], strides = [1, 1, 1]} : vector<4x16x8xf32> to vector<1x16x8xf32>
    %28 = vector.shape_cast %27 : vector<1x16x8xf32> to vector<16x8xf32>
    %c0_15 = arith.constant 0 : index
    %c8 = arith.constant 8 : index
    %29 = vector.load %arg19[%c0_15, %c8] : memref<16x32xf32, #tpu.memory_space<vmem>>, vector<16x8xf32>
    tpu.vector_store %arg19[%c0_15, %c8], %28 {strides = array<i32>} : memref<16x32xf32, #tpu.memory_space<vmem>>, vector<16x8xf32>,
    %30 = vector.extract_strided_slice %23 {offsets = [2, 0, 0], sizes = [1, 16, 8], strides = [1, 1, 1]} : vector<4x16x8xf32> to vector<1x16x8xf32>
    %31 = vector.shape_cast %30 : vector<1x16x8xf32> to vector<16x8xf32>
    %c0_16 = arith.constant 0 : index
    %c16 = arith.constant 16 : index
    %32 = vector.load %arg19[%c0_16, %c16] : memref<16x32xf32, #tpu.memory_space<vmem>>, vector<16x8xf32>
    tpu.vector_store %arg19[%c0_16, %c16], %31 {strides = array<i32>} : memref<16x32xf32, #tpu.memory_space<vmem>>, vector<16x8xf32>,
    %33 = vector.extract_strided_slice %23 {offsets = [3, 0, 0], sizes = [1, 16, 8], strides = [1, 1, 1]} : vector<4x16x8xf32> to vector<1x16x8xf32>
    %34 = vector.shape_cast %33 : vector<1x16x8xf32> to vector<16x8xf32>
    %c0_17 = arith.constant 0 : index
    %c24 = arith.constant 24 : index
    %35 = vector.load %arg19[%c0_17, %c24] : memref<16x32xf32, #tpu.memory_space<vmem>>, vector<16x8xf32>
    tpu.vector_store %arg19[%c0_17, %c24], %34 {strides = array<i32>} : memref<16x32xf32, #tpu.memory_space<vmem>>, vector<16x8xf32>,
    %c0_18 = arith.constant 0 : index
    %c0_19 = arith.constant 0 : index
    %36 = vector.load %arg19[%c0_18, %c0_19] : memref<16x32xf32, #tpu.memory_space<vmem>>, vector<16x32xf32>
    %c0_20 = arith.constant 0 : index
    %c0_21 = arith.constant 0 : index
    %37 = vector.load %arg5[%c0_20, %c0_21] : memref<32x32xf32, #tpu.memory_space<vmem>>, vector<32x32xf32>
    %cst_22 = arith.constant dense<0.000000e+00> : vector<16x32xf32>
    %38 = tpu.matmul %36, %37, %cst_22 {dimension_numbers = #tpu.dot_dimension_numbers<[1], [0], [0], [1], [0, 0, 1, 1], [], []>} : vector<16x32xf32>, vector<32x32xf32>, vector<16x32xf32> -> vector<16x32xf32>
    %c0_23 = arith.constant 0 : index
    %c0_24 = arith.constant 0 : index
    %39 = vector.load %arg6[%c0_23, %c0_24] : memref<1x32xf32, #tpu.memory_space<vmem>>, vector<1x32xf32>
    %40 = vector.broadcast %39 : vector<1x32xf32> to vector<16x32xf32>
    %41 = arith.addf %38, %40 : vector<16x32xf32>
    %42 = arith.addf %7, %41 : vector<16x32xf32>
    %c0_25 = arith.constant 0 : index
    %c0_26 = arith.constant 0 : index
    %43 = vector.load %arg9[%c0_25, %c0_26] : memref<1x32xf32, #tpu.memory_space<vmem>>, vector<1x32xf32>
    %c0_27 = arith.constant 0 : index
    %c0_28 = arith.constant 0 : index
    %44 = vector.load %arg10[%c0_27, %c0_28] : memref<1x32xf32, #tpu.memory_space<vmem>>, vector<1x32xf32>
    %cst_29 = arith.constant dense<0.000000e+00> : vector<16xf32>
    %45 = vector.multi_reduction <add>, %42, %cst_29 [1] : vector<16x32xf32> to vector<16xf32>
    %46 = vector.shape_cast %45 : vector<16xf32> to vector<16x1xf32>
    %cst_30 = arith.constant 3.200000e+01 : f32
    %47 = vector.broadcast %cst_30 : f32 to vector<16x1xf32>
    %48 = arith.divf %46, %47 : vector<16x1xf32>
    %49 = vector.broadcast %48 : vector<16x1xf32> to vector<16x32xf32>
    %50 = arith.subf %42, %49 : vector<16x32xf32>
    %51 = arith.mulf %50, %50 : vector<16x32xf32>
    %cst_31 = arith.constant dense<0.000000e+00> : vector<16xf32>
    %52 = vector.multi_reduction <add>, %51, %cst_31 [1] : vector<16x32xf32> to vector<16xf32>
    %53 = vector.shape_cast %52 : vector<16xf32> to vector<16x1xf32>
    %cst_32 = arith.constant 3.200000e+01 : f32
    %54 = vector.broadcast %cst_32 : f32 to vector<16x1xf32>
    %55 = arith.divf %53, %54 : vector<16x1xf32>
    %56 = vector.broadcast %48 : vector<16x1xf32> to vector<16x32xf32>
    %57 = arith.subf %42, %56 : vector<16x32xf32>
    %cst_33 = arith.constant 9.99999974E-6 : f32
    %58 = vector.broadcast %cst_33 : f32 to vector<16x1xf32>
    %59 = arith.addf %55, %58 : vector<16x1xf32>
    %60 = math.rsqrt %59 : vector<16x1xf32>
    %61 = vector.broadcast %60 : vector<16x1xf32> to vector<16x32xf32>
    %62 = arith.mulf %57, %61 : vector<16x32xf32>
    %63 = vector.broadcast %43 : vector<1x32xf32> to vector<16x32xf32>
    %64 = arith.mulf %62, %63 : vector<16x32xf32>
    %65 = vector.broadcast %44 : vector<1x32xf32> to vector<16x32xf32>
    %66 = arith.addf %64, %65 : vector<16x32xf32>
    %c0_34 = arith.constant 0 : index
    %c0_35 = arith.constant 0 : index
    %67 = vector.load %arg11[%c0_34, %c0_35] : memref<32x64xf32, #tpu.memory_space<vmem>>, vector<32x64xf32>
    %cst_36 = arith.constant dense<0.000000e+00> : vector<16x64xf32>
    %68 = tpu.matmul %66, %67, %cst_36 {dimension_numbers = #tpu.dot_dimension_numbers<[1], [0], [0], [1], [0, 0, 1, 1], [], []>} : vector<16x32xf32>, vector<32x64xf32>, vector<16x64xf32> -> vector<16x64xf32>
    %c0_37 = arith.constant 0 : index
    %c0_38 = arith.constant 0 : index
    %69 = vector.load %arg12[%c0_37, %c0_38] : memref<1x64xf32, #tpu.memory_space<vmem>>, vector<1x64xf32>
    %70 = vector.broadcast %69 : vector<1x64xf32> to vector<16x64xf32>
    %71 = arith.addf %68, %70 : vector<16x64xf32>
    %cst_39 = arith.constant 0.000000e+00 : f32
    %72 = vector.broadcast %cst_39 : f32 to vector<16x64xf32>
    %73 = arith.maximumf %71, %72 : vector<16x64xf32>
    %c0_40 = arith.constant 0 : index
    %c0_41 = arith.constant 0 : index
    %74 = vector.load %arg13[%c0_40, %c0_41] : memref<64x32xf32, #tpu.memory_space<vmem>>, vector<64x32xf32>
    %cst_42 = arith.constant dense<0.000000e+00> : vector<16x32xf32>
    %75 = tpu.matmul %73, %74, %cst_42 {dimension_numbers = #tpu.dot_dimension_numbers<[1], [0], [0], [1], [0, 0, 1, 1], [], []>} : vector<16x64xf32>, vector<64x32xf32>, vector<16x32xf32> -> vector<16x32xf32>
    %c0_43 = arith.constant 0 : index
    %c0_44 = arith.constant 0 : index
    %76 = vector.load %arg14[%c0_43, %c0_44] : memref<1x32xf32, #tpu.memory_space<vmem>>, vector<1x32xf32>
    %77 = vector.broadcast %76 : vector<1x32xf32> to vector<16x32xf32>
    %78 = arith.addf %75, %77 : vector<16x32xf32>
    %79 = arith.addf %42, %78 : vector<16x32xf32>
    %c0_45 = arith.constant 0 : index
    %c0_46 = arith.constant 0 : index
    %c0_47 = arith.constant 0 : index
    %80 = vector.load %arg15[%c0_45, %c0_46, %c0_47] : memref<1x16x32xf32, #tpu.memory_space<vmem>>, vector<1x16x32xf32>
    %81 = vector.shape_cast %80 : vector<1x16x32xf32> to vector<16x32xf32>
    %82 = vector.shape_cast %79 : vector<16x32xf32> to vector<1x16x32xf32>
    tpu.vector_store %arg15[%c0_45, %c0_46, %c0_47], %82 {strides = array<i32>} : memref<1x16x32xf32, #tpu.memory_space<vmem>>, vector<1x16x32xf32>,
    return
  }
  func.func @transform_0(%arg0: i32, %arg1: i32) -> (i32, i32, i32) {
    %c0_i32 = arith.constant 0 : i32
    %c0_i32_0 = arith.constant 0 : i32
    %c0_i32_1 = arith.constant 0 : i32
    return %arg0, %c0_i32, %c0_i32_0 : i32, i32, i32
  }
  func.func @transform_1(%arg0: i32, %arg1: i32) -> (i32, i32) {
    %c0_i32 = arith.constant 0 : i32
    %c0_i32_0 = arith.constant 0 : i32
    %c0_i32_1 = arith.constant 0 : i32
    return %c0_i32, %c0_i32_0 : i32, i32
  }
  func.func @transform_2(%arg0: i32, %arg1: i32) -> (i32, i32) {
    %c0_i32 = arith.constant 0 : i32
    %c0_i32_0 = arith.constant 0 : i32
    %c0_i32_1 = arith.constant 0 : i32
    return %c0_i32, %c0_i32_0 : i32, i32
  }
  func.func @transform_3(%arg0: i32, %arg1: i32) -> (i32, i32) {
    %c0_i32 = arith.constant 0 : i32
    %c0_i32_0 = arith.constant 0 : i32
    %c0_i32_1 = arith.constant 0 : i32
    return %c0_i32, %c0_i32_0 : i32, i32
  }
  func.func @transform_4(%arg0: i32, %arg1: i32) -> (i32, i32) {
    %c0_i32 = arith.constant 0 : i32
    %c0_i32_0 = arith.constant 0 : i32
    %c0_i32_1 = arith.constant 0 : i32
    return %c0_i32, %c0_i32_0 : i32, i32
  }
  func.func @transform_5(%arg0: i32, %arg1: i32) -> (i32, i32) {
    %c0_i32 = arith.constant 0 : i32
    %c0_i32_0 = arith.constant 0 : i32
    %c0_i32_1 = arith.constant 0 : i32
    return %c0_i32, %c0_i32_0 : i32, i32
  }
  func.func @transform_6(%arg0: i32, %arg1: i32) -> (i32, i32) {
    %c0_i32 = arith.constant 0 : i32
    %c0_i32_0 = arith.constant 0 : i32
    %c0_i32_1 = arith.constant 0 : i32
    return %c0_i32, %c0_i32_0 : i32, i32
  }
  func.func @transform_7(%arg0: i32, %arg1: i32) -> (i32, i32) {
    %c0_i32 = arith.constant 0 : i32
    %c0_i32_0 = arith.constant 0 : i32
    %c0_i32_1 = arith.constant 0 : i32
    return %c0_i32, %c0_i32_0 : i32, i32
  }
  func.func @transform_8(%arg0: i32, %arg1: i32) -> (i32, i32) {
    %c0_i32 = arith.constant 0 : i32
    %c0_i32_0 = arith.constant 0 : i32
    %c0_i32_1 = arith.constant 0 : i32
    return %c0_i32, %c0_i32_0 : i32, i32
  }
  func.func @transform_9(%arg0: i32, %arg1: i32) -> (i32, i32) {
    %c0_i32 = arith.constant 0 : i32
    %c0_i32_0 = arith.constant 0 : i32
    %c0_i32_1 = arith.constant 0 : i32
    return %c0_i32, %c0_i32_0 : i32, i32
  }
  func.func @transform_10(%arg0: i32, %arg1: i32) -> (i32, i32) {
    %c0_i32 = arith.constant 0 : i32
    %c0_i32_0 = arith.constant 0 : i32
    %c0_i32_1 = arith.constant 0 : i32
    return %c0_i32, %c0_i32_0 : i32, i32
  }
  func.func @transform_11(%arg0: i32, %arg1: i32) -> (i32, i32) {
    %c0_i32 = arith.constant 0 : i32
    %c0_i32_0 = arith.constant 0 : i32
    %c0_i32_1 = arith.constant 0 : i32
    return %c0_i32, %c0_i32_0 : i32, i32
  }
  func.func @transform_12(%arg0: i32, %arg1: i32) -> (i32, i32) {
    %c0_i32 = arith.constant 0 : i32
    %c0_i32_0 = arith.constant 0 : i32
    %c0_i32_1 = arith.constant 0 : i32
    return %c0_i32, %c0_i32_0 : i32, i32
  }
  func.func @transform_13(%arg0: i32, %arg1: i32) -> (i32, i32, i32) {
    %c0_i32 = arith.constant 0 : i32
    %c0_i32_0 = arith.constant 0 : i32
    return %arg0, %arg1, %c0_i32 : i32, i32, i32
  }
}

</mosaic_0001>

<llo_original>
// kernel: tpu_custom_call.1
$region0: #{tpu_custom_call.1}
  #allocation0 [shape = 'u32[]', space=smem, size = 0x4, offset = 0x4, fixed_abs, tag = 'smem constant byte address 0x4 - core index']
  #allocation1 [shape = 'u32[144,128]{1,0:T(1,128)}', space=vmem, size = 0x12000, scoped, tag = 'internal scratch']
  #allocation2 [shape = 'f32[4,32,8]{2,1,0:T(8,128)}', space=vmem, size = 0x10000, scoped, tag = 'scratch operand']
  #allocation3 [shape = 'f32[4,32,8]{2,1,0:T(8,128)}', space=vmem, size = 0x10000, scoped, tag = 'scratch operand']
  #allocation4 [shape = 'f32[4,32,8]{2,1,0:T(8,128)}', space=vmem, size = 0x10000, scoped, tag = 'scratch operand']
  #allocation5 [shape = 'f32[16,32]{1,0:T(8,128)}', space=vmem, size = 0x2000, scoped, tag = 'scratch operand']
  %s0 = inlined_call_operand.vmem [shape: f32[2,32,32], index: 0, kind: input, shape index: {}]
  %s1 = inlined_call_operand.vmem [shape: f32[32,96], index: 1, kind: input, shape index: {}]
  %s2 = inlined_call_operand.vmem [shape: f32[1,96], index: 2, kind: input, shape index: {}]
  %s3 = inlined_call_operand.hbm [shape: f32[32,32], index: 3, kind: input, shape index: {}]
  %s4 = inlined_call_operand.vmem [shape: f32[1,32], index: 4, kind: input, shape index: {}]
  %s5 = inlined_call_operand.vmem [shape: f32[1,32], index: 5, kind: input, shape index: {}]
  %s6 = inlined_call_operand.vmem [shape: f32[1,32], index: 6, kind: input, shape index: {}]
  %s7 = inlined_call_operand.vmem [shape: f32[1,32], index: 7, kind: input, shape index: {}]
  %s8 = inlined_call_operand.vmem [shape: f32[1,32], index: 8, kind: input, shape index: {}]
  %s9 = inlined_call_operand.hbm [shape: f32[32,64], index: 9, kind: input, shape index: {}]
  %s10 = inlined_call_operand.vmem [shape: f32[1,64], index: 10, kind: input, shape index: {}]
  %s11 = inlined_call_operand.vmem [shape: f32[64,32], index: 11, kind: input, shape index: {}]
  %s12 = inlined_call_operand.vmem [shape: f32[1,32], index: 12, kind: input, shape index: {}]
  %s13 = inlined_call_operand.hbm [shape: f32[2,32,32], index: 13, kind: output, shape index: {}]
  %s14 = sld [smem:[#allocation0]]
  $region104: #{tpu_custom_call.1} parent=0
    _
  %s16 = ssub.s32 1, %s14
  %s17 = scalar_select 0, %s16, %s14
  $region1: #{tpu_custom_call.1} parent=0
    #allocation6 [shape = 'u8[16384]{0}', space=vmem, size = 0x4000, scoped, tag = 'input window, operand 3, single buffered']
    #allocation7 [shape = 's32[2]{0}', space=sflag, size = 0x8, scoped, tag = 'scoped memory for tpu_custom_call.1']
    #allocation8 [shape = 's32[2]{0}', space=sflag, size = 0x8, scoped, tag = 'scoped memory for tpu_custom_call.1']
    #allocation9 [shape = 'u8[16384]{0}', space=vmem, size = 0x4000, scoped, tag = 'input window, operand 9, single buffered']
    #allocation10 [shape = 's32[1]{0}', space=sflag, size = 0x4, scoped, tag = 'scoped memory for tpu_custom_call.1']
    #allocation11 [shape = 'u8[16384]{0}', space=vmem, size = 0x4000, scoped, tag = 'output window, operand 0']
    %18 = vsyncpa [#allocation7], 0
    %19 = vsyncpa [#allocation10], 0
    %20 = vsyncpa [#allocation8], 0
    %s21 = scalar_lea.sflag [#allocation8], 1
    %22 = vsyncpa %s21, 0
    loop: start=0, step=1, limit=6
    $region2: #{tpu_custom_call.1} parent=1 // loop_pre_header
      _
    $region3: #{tpu_custom_call.1} parent=1 // loop_header
      %s24 = sphi 0, %s28
      %p25 = scmp.ge.s32.totalorder %s24, 6
      %s31 = sphi 0, %s43
      %s32 = sphi 0, %s39
      %s33 = sphi 0, %s31
      %s34 = sphi 0, %s32
      %s35 = sphi 0, %s33
      %s36 = sphi 0, %s34
      %s46 = sphi 0, %s48
      %s49 = sphi 0, %s46
      %s50 = sphi 0, %s49
      %s66 = sphi 0, %s50
      %s70 = sphi 0, %s70
      %s72 = sphi 0, %s70
      %s73 = sphi 0, %s72
      %s87 = sphi 0, %s73
      %s91 = sphi 0, %s91
      %s93 = sphi 0, %s91
      %s94 = sphi 0, %s93
      %s108 = sphi 0, %s94
      %s112 = sphi 0, %s112
      %s114 = sphi 0, %s112
      %s115 = sphi 0, %s114
      %s129 = sphi 0, %s115
      %s133 = sphi 0, %s133
      %s135 = sphi 0, %s133
      %s136 = sphi 0, %s135
      %s150 = sphi 0, %s136
      %s154 = sphi 0, %s154
      %s156 = sphi 0, %s154
      %s157 = sphi 0, %s156
      %s171 = sphi 0, %s157
      %s175 = sphi 0, %s175
      %s177 = sphi 0, %s175
      %s178 = sphi 0, %s177
      %s192 = sphi 0, %s178
      %s196 = sphi 0, %s196
      %s198 = sphi 0, %s196
      %s199 = sphi 0, %s198
      %s213 = sphi 0, %s199
      %s217 = sphi 0, %s217
      %s219 = sphi 0, %s217
      %s220 = sphi 0, %s219
      %s234 = sphi 0, %s220
      %s238 = sphi 0, %s238
      %s240 = sphi 0, %s238
      %s241 = sphi 0, %s240
      %s255 = sphi 0, %s241
      %s259 = sphi 0, %s259
      %s261 = sphi 0, %s259
      %s262 = sphi 0, %s261
      %s276 = sphi 0, %s262
      %s280 = sphi 0, %s280
      %s282 = sphi 0, %s280
      %s283 = sphi 0, %s282
      %s297 = sphi 0, %s283
      %s301 = sphi 0, %s301
      %s303 = sphi 0, %s301
      %s304 = sphi 0, %s303
      %s318 = sphi 0, %s304
      %s326 = sphi 0, %s328
      %s329 = sphi 0, %s326
      %s330 = sphi 0, %s329
      %s346 = sphi 0, %s330
    $region4: #{tpu_custom_call.1} parent=1 // loop_header_branch
      %27 = sbr.rel (%p25) target = $region8
    $region5: #{tpu_custom_call.1} parent=1 // loop_body
      %s29 = ssub.s32 %s24, 1
      %s30 = ssub.s32 %s24, 2
      %s37 = sadd.s32 1, %s32
      %p38 = scmp.ge.s32.totalorder %s37, 2
      %s39 = scalar_select %p38, 0, %s37
      %s40 = sadd.s32 1, %s31
      %s41 = scalar_select %p38, %s40, %s31
      %p42 = scmp.ge.s32.totalorder %s41, 2
      %s43 = scalar_select %p42, 0, %s41
      %s44 = ssub.s32 %s31, %s43
      %p45 = scmp.eq.s32.totalorder %s44, 0
      %s47 = sadd.s32 %s46, 1
      %s48 = scalar_select %p45, %s46, %s47
      %p51 = pneg %p45
      %p52 = scmp.eq.s32.totalorder %s24, 3
      %p53 = por %p51, %p52
      %p54 = scmp.ne.s32.totalorder %s46, %s49
      %p55 = scmp.eq.s32.totalorder %s24, 0
      %p56 = por %p54, %p55
      %p57 = scmp.ne.s32.totalorder %s46, %s49
      %p58 = scmp.eq.s32.totalorder %s29, 3
      %p59 = por %p57, %p58
      %p60 = scmp.ne.s32.totalorder %s49, %s50
      %p61 = scmp.eq.s32.totalorder %s29, 0
      %p62 = por %p60, %p61
      %p63 = scmp.ne.s32.totalorder %s49, %s50
      %p64 = scmp.eq.s32.totalorder %s30, 3
      %p65 = por %p63, %p64
      %p67 = scmp.ne.s32.totalorder %s50, %s66
      %p68 = scmp.eq.s32.totalorder %s30, 0
      %p69 = por %p67, %p68
      %s71 = sadd.s32 %s70, 1
      %p74 = scmp.eq.s32.totalorder %s24, 3
      %p75 = scmp.ne.s32.totalorder %s70, %s72
      %p76 = scmp.eq.s32.totalorder %s24, 0
      %p77 = por %p75, %p76
      %p78 = scmp.ne.s32.totalorder %s70, %s72
      %p79 = scmp.eq.s32.totalorder %s29, 3
      %p80 = por %p78, %p79
      %p81 = scmp.ne.s32.totalorder %s72, %s73
      %p82 = scmp.eq.s32.totalorder %s29, 0
      %p83 = por %p81, %p82
      %p84 = scmp.ne.s32.totalorder %s72, %s73
      %p85 = scmp.eq.s32.totalorder %s30, 3
      %p86 = por %p84, %p85
      %p88 = scmp.ne.s32.totalorder %s73, %s87
      %p89 = scmp.eq.s32.totalorder %s30, 0
      %p90 = por %p88, %p89
      %s92 = sadd.s32 %s91, 1
      %p95 = scmp.eq.s32.totalorder %s24, 3
      %p96 = scmp.ne.s32.totalorder %s91, %s93
      %p97 = scmp.eq.s32.totalorder %s24, 0
      %p98 = por %p96, %p97
      %p99 = scmp.ne.s32.totalorder %s91, %s93
      %p100 = scmp.eq.s32.totalorder %s29, 3
      %p101 = por %p99, %p100
      %p102 = scmp.ne.s32.totalorder %s93, %s94
      %p103 = scmp.eq.s32.totalorder %s29, 0
      %p104 = por %p102, %p103
      %p105 = scmp.ne.s32.totalorder %s93, %s94
      %p106 = scmp.eq.s32.totalorder %s30, 3
      %p107 = por %p105, %p106
      %p109 = scmp.ne.s32.totalorder %s94, %s108
      %p110 = scmp.eq.s32.totalorder %s30, 0
      %p111 = por %p109, %p110
      %s113 = sadd.s32 %s112, 1
      %p116 = scmp.eq.s32.totalorder %s24, 3
      %p117 = scmp.ne.s32.totalorder %s112, %s114
      %p118 = scmp.eq.s32.totalorder %s24, 0
      %p119 = por %p117, %p118
      %p120 = scmp.ne.s32.totalorder %s112, %s114
      %p121 = scmp.eq.s32.totalorder %s29, 3
      %p122 = por %p120, %p121
      %p123 = scmp.ne.s32.totalorder %s114, %s115
      %p124 = scmp.eq.s32.totalorder %s29, 0
      %p125 = por %p123, %p124
      %p126 = scmp.ne.s32.totalorder %s114, %s115
      %p127 = scmp.eq.s32.totalorder %s30, 3
      %p128 = por %p126, %p127
      %p130 = scmp.ne.s32.totalorder %s115, %s129
      %p131 = scmp.eq.s32.totalorder %s30, 0
      %p132 = por %p130, %p131
      %s134 = sadd.s32 %s133, 1
      %p137 = scmp.eq.s32.totalorder %s24, 3
      %p138 = scmp.ne.s32.totalorder %s133, %s135
      %p139 = scmp.eq.s32.totalorder %s24, 0
      %p140 = por %p138, %p139
      %p141 = scmp.ne.s32.totalorder %s133, %s135
      %p142 = scmp.eq.s32.totalorder %s29, 3
      %p143 = por %p141, %p142
      %p144 = scmp.ne.s32.totalorder %s135, %s136
      %p145 = scmp.eq.s32.totalorder %s29, 0
      %p146 = por %p144, %p145
      %p147 = scmp.ne.s32.totalorder %s135, %s136
      %p148 = scmp.eq.s32.totalorder %s30, 3
      %p149 = por %p147, %p148
      %p151 = scmp.ne.s32.totalorder %s136, %s150
      %p152 = scmp.eq.s32.totalorder %s30, 0
      %p153 = por %p151, %p152
      %s155 = sadd.s32 %s154, 1
      %p158 = scmp.eq.s32.totalorder %s24, 3
      %p159 = scmp.ne.s32.totalorder %s154, %s156
      %p160 = scmp.eq.s32.totalorder %s24, 0
      %p161 = por %p159, %p160
      %p162 = scmp.ne.s32.totalorder %s154, %s156
      %p163 = scmp.eq.s32.totalorder %s29, 3
      %p164 = por %p162, %p163
      %p165 = scmp.ne.s32.totalorder %s156, %s157
      %p166 = scmp.eq.s32.totalorder %s29, 0
      %p167 = por %p165, %p166
      %p168 = scmp.ne.s32.totalorder %s156, %s157
      %p169 = scmp.eq.s32.totalorder %s30, 3
      %p170 = por %p168, %p169
      %p172 = scmp.ne.s32.totalorder %s157, %s171
      %p173 = scmp.eq.s32.totalorder %s30, 0
      %p174 = por %p172, %p173
      %s176 = sadd.s32 %s175, 1
      %p179 = scmp.eq.s32.totalorder %s24, 3
      %p180 = scmp.ne.s32.totalorder %s175, %s177
      %p181 = scmp.eq.s32.totalorder %s24, 0
      %p182 = por %p180, %p181
      %p183 = scmp.ne.s32.totalorder %s175, %s177
      %p184 = scmp.eq.s32.totalorder %s29, 3
      %p185 = por %p183, %p184
      %p186 = scmp.ne.s32.totalorder %s177, %s178
      %p187 = scmp.eq.s32.totalorder %s29, 0
      %p188 = por %p186, %p187
      %p189 = scmp.ne.s32.totalorder %s177, %s178
      %p190 = scmp.eq.s32.totalorder %s30, 3
      %p191 = por %p189, %p190
      %p193 = scmp.ne.s32.totalorder %s178, %s192
      %p194 = scmp.eq.s32.totalorder %s30, 0
      %p195 = por %p193, %p194
      %s197 = sadd.s32 %s196, 1
      %p200 = scmp.eq.s32.totalorder %s24, 3
      %p201 = scmp.ne.s32.totalorder %s196, %s198
      %p202 = scmp.eq.s32.totalorder %s24, 0
      %p203 = por %p201, %p202
      %p204 = scmp.ne.s32.totalorder %s196, %s198
      %p205 = scmp.eq.s32.totalorder %s29, 3
      %p206 = por %p204, %p205
      %p207 = scmp.ne.s32.totalorder %s198, %s199
      %p208 = scmp.eq.s32.totalorder %s29, 0
      %p209 = por %p207, %p208
      %p210 = scmp.ne.s32.totalorder %s198, %s199
      %p211 = scmp.eq.s32.totalorder %s30, 3
      %p212 = por %p210, %p211
      %p214 = scmp.ne.s32.totalorder %s199, %s213
      %p215 = scmp.eq.s32.totalorder %s30, 0
      %p216 = por %p214, %p215
      %s218 = sadd.s32 %s217, 1
      %p221 = scmp.eq.s32.totalorder %s24, 3
      %p222 = scmp.ne.s32.totalorder %s217, %s219
      %p223 = scmp.eq.s32.totalorder %s24, 0
      %p224 = por %p222, %p223
      %p225 = scmp.ne.s32.totalorder %s217, %s219
      %p226 = scmp.eq.s32.totalorder %s29, 3
      %p227 = por %p225, %p226
      %p228 = scmp.ne.s32.totalorder %s219, %s220
      %p229 = scmp.eq.s32.totalorder %s29, 0
      %p230 = por %p228, %p229
      %p231 = scmp.ne.s32.totalorder %s219, %s220
      %p232 = scmp.eq.s32.totalorder %s30, 3
      %p233 = por %p231, %p232
      %p235 = scmp.ne.s32.totalorder %s220, %s234
      %p236 = scmp.eq.s32.totalorder %s30, 0
      %p237 = por %p235, %p236
      %s239 = sadd.s32 %s238, 1
      %p242 = scmp.eq.s32.totalorder %s24, 3
      %p243 = scmp.ne.s32.totalorder %s238, %s240
      %p244 = scmp.eq.s32.totalorder %s24, 0
      %p245 = por %p243, %p244
      %p246 = scmp.ne.s32.totalorder %s238, %s240
      %p247 = scmp.eq.s32.totalorder %s29, 3
      %p248 = por %p246, %p247
      %p249 = scmp.ne.s32.totalorder %s240, %s241
      %p250 = scmp.eq.s32.totalorder %s29, 0
      %p251 = por %p249, %p250
      %p252 = scmp.ne.s32.totalorder %s240, %s241
      %p253 = scmp.eq.s32.totalorder %s30, 3
      %p254 = por %p252, %p253
      %p256 = scmp.ne.s32.totalorder %s241, %s255
      %p257 = scmp.eq.s32.totalorder %s30, 0
      %p258 = por %p256, %p257
      %s260 = sadd.s32 %s259, 1
      %p263 = scmp.eq.s32.totalorder %s24, 3
      %p264 = scmp.ne.s32.totalorder %s259, %s261
      %p265 = scmp.eq.s32.totalorder %s24, 0
      %p266 = por %p264, %p265
      %p267 = scmp.ne.s32.totalorder %s259, %s261
      %p268 = scmp.eq.s32.totalorder %s29, 3
      %p269 = por %p267, %p268
      %p270 = scmp.ne.s32.totalorder %s261, %s262
      %p271 = scmp.eq.s32.totalorder %s29, 0
      %p272 = por %p270, %p271
      %p273 = scmp.ne.s32.totalorder %s261, %s262
      %p274 = scmp.eq.s32.totalorder %s30, 3
      %p275 = por %p273, %p274
      %p277 = scmp.ne.s32.totalorder %s262, %s276
      %p278 = scmp.eq.s32.totalorder %s30, 0
      %p279 = por %p277, %p278
      %s281 = sadd.s32 %s280, 1
      %p284 = scmp.eq.s32.totalorder %s24, 3
      %p285 = scmp.ne.s32.totalorder %s280, %s282
      %p286 = scmp.eq.s32.totalorder %s24, 0
      %p287 = por %p285, %p286
      %p288 = scmp.ne.s32.totalorder %s280, %s282
      %p289 = scmp.eq.s32.totalorder %s29, 3
      %p290 = por %p288, %p289
      %p291 = scmp.ne.s32.totalorder %s282, %s283
      %p292 = scmp.eq.s32.totalorder %s29, 0
      %p293 = por %p291, %p292
      %p294 = scmp.ne.s32.totalorder %s282, %s283
      %p295 = scmp.eq.s32.totalorder %s30, 3
      %p296 = por %p294, %p295
      %p298 = scmp.ne.s32.totalorder %s283, %s297
      %p299 = scmp.eq.s32.totalorder %s30, 0
      %p300 = por %p298, %p299
      %s302 = sadd.s32 %s301, 1
      %p305 = scmp.eq.s32.totalorder %s24, 3
      %p306 = scmp.ne.s32.totalorder %s301, %s303
      %p307 = scmp.eq.s32.totalorder %s24, 0
      %p308 = por %p306, %p307
      %p309 = scmp.ne.s32.totalorder %s301, %s303
      %p310 = scmp.eq.s32.totalorder %s29, 3
      %p311 = por %p309, %p310
      %p312 = scmp.ne.s32.totalorder %s303, %s304
      %p313 = scmp.eq.s32.totalorder %s29, 0
      %p314 = por %p312, %p313
      %p315 = scmp.ne.s32.totalorder %s303, %s304
      %p316 = scmp.eq.s32.totalorder %s30, 3
      %p317 = por %p315, %p316
      %p319 = scmp.ne.s32.totalorder %s304, %s318
      %p320 = scmp.eq.s32.totalorder %s30, 0
      %p321 = por %p319, %p320
      %s322 = ssub.s32 %s31, %s43
      %s323 = ssub.s32 %s32, %s39
      %s324 = sor.u32 %s322, %s323
      %p325 = scmp.eq.s32.totalorder %s324, 0
      %s327 = sadd.s32 %s326, 1
      %s328 = scalar_select %p325, %s326, %s327
      %p331 = pneg %p325
      %p332 = scmp.eq.s32.totalorder %s24, 3
      %p333 = por %p331, %p332
      %p334 = scmp.ne.s32.totalorder %s326, %s329
      %p335 = scmp.eq.s32.totalorder %s24, 0
      %p336 = por %p334, %p335
      %p337 = scmp.ne.s32.totalorder %s326, %s329
      %p338 = scmp.eq.s32.totalorder %s29, 3
      %p339 = por %p337, %p338
      %p340 = scmp.ne.s32.totalorder %s329, %s330
      %p341 = scmp.eq.s32.totalorder %s29, 0
      %p342 = por %p340, %p341
      %p343 = scmp.ne.s32.totalorder %s329, %s330
      %p344 = scmp.eq.s32.totalorder %s30, 3
      %p345 = por %p343, %p344
      %p347 = scmp.ne.s32.totalorder %s330, %s346
      %p348 = scmp.eq.s32.totalorder %s30, 0
      %p349 = por %p347, %p348
      %p350 = scmp.le.s32.totalorder 1, %s24
      %p351 = scmp.lt.s32.totalorder %s24, 5
      %p352 = pnand %p350, %p351
      %p353 = pneg %p352
      // Predicated region
      $region9: #{tpu_custom_call.1} parent=5 // pred_check
        _
      $region10: #{tpu_custom_call.1} parent=5 // pred_check_branch
        %355 = sbr.rel (%p352) target = $region12
      $region11: #{tpu_custom_call.1} parent=5 // pred_region
        %s356 = ssub.s32 %s24, 1
        // Predicated region
        $region13: #{tpu_custom_call.1} parent=11 // pred_check
          %p357 = pneg %p83
        $region14: #{tpu_custom_call.1} parent=11 // pred_check_branch
          %359 = sbr.rel (%p357) target = $region16
        $region15: #{tpu_custom_call.1} parent=11 // pred_region
          _
        $region16: #{tpu_custom_call.1} parent=11 // pred_fallthru
          _
        // Predicated region
        $region17: #{tpu_custom_call.1} parent=11 // pred_check
          %p360 = pneg %p104
        $region18: #{tpu_custom_call.1} parent=11 // pred_check_branch
          %362 = sbr.rel (%p360) target = $region20
        $region19: #{tpu_custom_call.1} parent=11 // pred_region
          _
        $region20: #{tpu_custom_call.1} parent=11 // pred_fallthru
          _
        // Predicated region
        $region21: #{tpu_custom_call.1} parent=11 // pred_check
          %p363 = pneg %p125
        $region22: #{tpu_custom_call.1} parent=11 // pred_check_branch
          %365 = sbr.rel (%p363) target = $region24
        $region23: #{tpu_custom_call.1} parent=11 // pred_region
          %s367 = ssub.s32 512, 512
          %368 = vsyncadd [#allocation7], %s367
          %s369 = sshll.u32 [#allocation6], 4
          %s370 = int_to_ptr.vmem [resolvable:$true] %s369
          %375 = dma.hbm_to_vmem [thread:$0]  %s3, 512, %s370, [#allocation7], 128, 128, 8
        $region24: #{tpu_custom_call.1} parent=11 // pred_fallthru
          _
        // Predicated region
        $region25: #{tpu_custom_call.1} parent=11 // pred_check
          %p376 = pneg %p146
        $region26: #{tpu_custom_call.1} parent=11 // pred_check_branch
          %378 = sbr.rel (%p376) target = $region28
        $region27: #{tpu_custom_call.1} parent=11 // pred_region
          _
        $region28: #{tpu_custom_call.1} parent=11 // pred_fallthru
          _
        // Predicated region
        $region29: #{tpu_custom_call.1} parent=11 // pred_check
          %p379 = pneg %p167
        $region30: #{tpu_custom_call.1} parent=11 // pred_check_branch
          %381 = sbr.rel (%p379) target = $region32
        $region31: #{tpu_custom_call.1} parent=11 // pred_region
          _
        $region32: #{tpu_custom_call.1} parent=11 // pred_fallthru
          _
        // Predicated region
        $region33: #{tpu_custom_call.1} parent=11 // pred_check
          %p382 = pneg %p188
        $region34: #{tpu_custom_call.1} parent=11 // pred_check_branch
          %384 = sbr.rel (%p382) target = $region36
        $region35: #{tpu_custom_call.1} parent=11 // pred_region
          _
        $region36: #{tpu_custom_call.1} parent=11 // pred_fallthru
          _
        // Predicated region
        $region37: #{tpu_custom_call.1} parent=11 // pred_check
          %p385 = pneg %p209
        $region38: #{tpu_custom_call.1} parent=11 // pred_check_branch
          %387 = sbr.rel (%p385) target = $region40
        $region39: #{tpu_custom_call.1} parent=11 // pred_region
          _
        $region40: #{tpu_custom_call.1} parent=11 // pred_fallthru
          _
        // Predicated region
        $region41: #{tpu_custom_call.1} parent=11 // pred_check
          %p388 = pneg %p230
        $region42: #{tpu_custom_call.1} parent=11 // pred_check_branch
          %390 = sbr.rel (%p388) target = $region44
        $region43: #{tpu_custom_call.1} parent=11 // pred_region
          _
        $region44: #{tpu_custom_call.1} parent=11 // pred_fallthru
          _
        // Predicated region
        $region45: #{tpu_custom_call.1} parent=11 // pred_check
          %p391 = pneg %p251
        $region46: #{tpu_custom_call.1} parent=11 // pred_check_branch
          %393 = sbr.rel (%p391) target = $region48
        $region47: #{tpu_custom_call.1} parent=11 // pred_region
          %s395 = ssub.s32 512, 512
          %396 = vsyncadd [#allocation10], %s395
          %s397 = sshll.u32 [#allocation9], 4
          %s398 = int_to_ptr.vmem [resolvable:$true] %s397
          %403 = dma.hbm_to_vmem [thread:$0]  %s9, 512, %s398, [#allocation10], 128, 128, 8
        $region48: #{tpu_custom_call.1} parent=11 // pred_fallthru
          _
        // Predicated region
        $region49: #{tpu_custom_call.1} parent=11 // pred_check
          %p404 = pneg %p272
        $region50: #{tpu_custom_call.1} parent=11 // pred_check_branch
          %406 = sbr.rel (%p404) target = $region52
        $region51: #{tpu_custom_call.1} parent=11 // pred_region
          _
        $region52: #{tpu_custom_call.1} parent=11 // pred_fallthru
          _
        // Predicated region
        $region53: #{tpu_custom_call.1} parent=11 // pred_check
          %p407 = pneg %p293
        $region54: #{tpu_custom_call.1} parent=11 // pred_check_branch
          %409 = sbr.rel (%p407) target = $region56
        $region55: #{tpu_custom_call.1} parent=11 // pred_region
          _
        $region56: #{tpu_custom_call.1} parent=11 // pred_fallthru
          _
        // Predicated region
        $region57: #{tpu_custom_call.1} parent=11 // pred_check
          %p410 = pneg %p314
        $region58: #{tpu_custom_call.1} parent=11 // pred_check_branch
          %412 = sbr.rel (%p410) target = $region60
        $region59: #{tpu_custom_call.1} parent=11 // pred_region
          _
        $region60: #{tpu_custom_call.1} parent=11 // pred_fallthru
          _
      $region12: #{tpu_custom_call.1} parent=5 // pred_fallthru
        _
      %p413 = scmp.lt.s32.totalorder %s24, 4
      // Predicated region
      $region61: #{tpu_custom_call.1} parent=5 // pred_check
        %p414 = pneg %p413
      $region62: #{tpu_custom_call.1} parent=5 // pred_check_branch
        %416 = sbr.rel (%p414) target = $region64
      $region63: #{tpu_custom_call.1} parent=5 // pred_region
        // Predicated region
        $region65: #{tpu_custom_call.1} parent=63 // pred_check
          %p417 = pneg %p56
        $region66: #{tpu_custom_call.1} parent=63 // pred_check_branch
          %419 = sbr.rel (%p417) target = $region68
        $region67: #{tpu_custom_call.1} parent=63 // pred_region
          %p420 = scmp.lt.s32.totalorder %s31, 1
          %s421 = scalar_select %p420, %s31, 1
          %s422 = smul.addr %s421, 4
          %s423 = smul.addr %s422, 8
          %s424 = scalar_lea.vmem %s0, %s423
        $region68: #{tpu_custom_call.1} parent=63 // pred_fallthru
          _
      $region64: #{tpu_custom_call.1} parent=5 // pred_fallthru
        _
      %p425 = scmp.le.s32.totalorder 1, %s24
      %p426 = scmp.lt.s32.totalorder %s24, 5
      %p427 = pnand %p425, %p426
      %p428 = pneg %p427
      // Predicated region
      $region69: #{tpu_custom_call.1} parent=5 // pred_check
        _
      $region70: #{tpu_custom_call.1} parent=5 // pred_check_branch
        %430 = sbr.rel (%p427) target = $region72
      $region71: #{tpu_custom_call.1} parent=5 // pred_region
        %s431 = ssub.s32 %s24, 1
        // Predicated region
        $region73: #{tpu_custom_call.1} parent=71 // pred_check
          %p432 = pneg %p125
        $region74: #{tpu_custom_call.1} parent=71 // pred_check_branch
          %434 = sbr.rel (%p432) target = $region76
        $region75: #{tpu_custom_call.1} parent=71 // pred_region
          %435 = dma.done [#allocation7], 512
        $region76: #{tpu_custom_call.1} parent=71 // pred_fallthru
          _
        // Predicated region
        $region77: #{tpu_custom_call.1} parent=71 // pred_check
          %p436 = pneg %p251
        $region78: #{tpu_custom_call.1} parent=71 // pred_check_branch
          %438 = sbr.rel (%p436) target = $region80
        $region79: #{tpu_custom_call.1} parent=71 // pred_region
          %439 = dma.done [#allocation10], 512
        $region80: #{tpu_custom_call.1} parent=71 // pred_fallthru
          _
        %p440 = scmp.lt.s32.totalorder %s33, 1
        %s441 = scalar_select %p440, %s33, 1
        %s442 = smul.addr %s441, 4
        %s443 = smul.addr %s442, 8
        %s444 = scalar_lea.vmem %s0, %s443
        %p445 = pneg %p62
        %p446 = pneg %p59
        %p447 = pneg %p83
        %p448 = pneg %p80
        %p449 = pneg %p104
        %p450 = pneg %p101
        %p451 = pneg %p125
        %p452 = pneg %p122
        %p453 = pneg %p146
        %p454 = pneg %p143
        %p455 = pneg %p167
        %p456 = pneg %p164
        %p457 = pneg %p188
        %p458 = pneg %p185
        %p459 = pneg %p209
        %p460 = pneg %p206
        %p461 = pneg %p230
        %p462 = pneg %p227
        %p463 = pneg %p251
        %p464 = pneg %p248
        %p465 = pneg %p272
        %p466 = pneg %p269
        %p467 = pneg %p293
        %p468 = pneg %p290
        %p469 = pneg %p314
        %p470 = pneg %p311
        %p471 = pneg %p342
        %p472 = pneg %p339
        %s473 = sand.u32 %s329, 1
        %s474 = scalar_lea.sflag [#allocation8], %s473
        %s475 = sand.u32 %s329, 1
        %s476 = smul.addr %s475, 16
        %s477 = scalar_lea.vmem [#allocation11], %s476
        %p478 = scmp.lt.s32.totalorder %s33, 1
        %s479 = scalar_select %p478, %s33, 1
        %s480 = smul.addr %s479, 4
        %s481 = smul.addr %s480, 8
        %s482 = scalar_lea.vmem %s0, %s481
        %s483 = smul.u32 2, %s34
        %p484 = scmp.eq.s32.totalorder %s34, 0
        // Predicated region
        $region81: #{tpu_custom_call.1} parent=71 // pred_check
          %p485 = pneg %p484
        $region82: #{tpu_custom_call.1} parent=71 // pred_check_branch
          %487 = sbr.rel (%p485) target = $region84
        $region83: #{tpu_custom_call.1} parent=71 // pred_region
          loop: start=0, step=1, limit=2
          $region85: #{tpu_custom_call.1} parent=83 // loop_pre_header
            _
          $region86: #{tpu_custom_call.1} parent=83 // loop_header
            %s489 = sphi 0, %s493
            %p490 = scmp.ge.s32.totalorder %s489, 2
          $region87: #{tpu_custom_call.1} parent=83 // loop_header_branch
            %492 = sbr.rel (%p490) target = $region91
          $region88: #{tpu_custom_call.1} parent=83 // loop_body
            %s494 = smul.u32 %s489, 16
            %s495 = scalar_lea.vmem %s482, %s494
            %v496 = vld [vmem:[%s495] sm:$0xff]
            %v497 = vld [vmem:[%s495 + $0x8] sm:$0xff]
            %v498 = vld [vmem:[%s5] sm:$0x1]
            %v499 = vld [vmem:[%s6] sm:$0x1]
            %vm500 = vcmask 261120
            %v501 = vsel %vm500, %v496, 0.0
            %502 = vadd.xlane.f32.xlu0 %v501
            %v503 = vpop.xlane.xlu0 %502
            %v504 = vsel %vm500, %v497, 0.0
            %505 = vadd.xlane.f32.xlu0 %v504
            %v506 = vpop.xlane.xlu0 %505
            %v507 = vrcp.pop 32.0
            %v508 = vmul.f32 %v503, %v507
            %v509 = vmul.f32 %v506, %v507
            %v510 = vsub.f32 %v496, %v508
            %v511 = vsub.f32 %v497, %v509
            %v512 = vmul.f32 %v510, %v510
            %v513 = vmul.f32 %v511, %v511
            %v514 = vsel %vm500, %v512, 0.0
            %515 = vadd.xlane.f32.xlu0 %v514
            %v516 = vpop.xlane.xlu0 %515
            %v517 = vsel %vm500, %v513, 0.0
            %518 = vadd.xlane.f32.xlu0 %v517
            %v519 = vpop.xlane.xlu0 %518
            %v520 = vmul.f32 %v516, %v507
            %v521 = vmul.f32 %v519, %v507
            %v522 = vadd.f32 %v520, 1e-05
            %v523 = vadd.f32 %v521, 1e-05
            %v524 = vrsqrt.pop %v522
            %v525 = vrsqrt.pop %v523
            %v526 = vmul.f32 %v510, %v524
            %v527 = vmul.f32 %v511, %v525
            %v529 = vlaneseq
            %v530 = vshrl.u32 %v529, 7
            %v531 = vsub.s32 0, %v530
            %v532 = vrot.slane %v498, %v531
            %v534 = vmul.f32 %v526, %v532
            %v535 = vmul.f32 %v527, %v532
            %v537 = vlaneseq
            %v538 = vshrl.u32 %v537, 7
            %v539 = vsub.s32 0, %v538
            %v540 = vrot.slane %v499, %v539
            %v542 = vadd.f32 %v534, %v540
            %v543 = vadd.f32 %v535, %v540
            %v544 = vld [vmem:[%s1] sm:$0xff]
            %v545 = vld [vmem:[%s1 + $0x8] sm:$0xff]
            %v546 = vld [vmem:[%s1 + $0x10] sm:$0xff]
            %v547 = vld [vmem:[%s1 + $0x18] sm:$0xff]
            %v548 = vld [vmem:[%s2] sm:$0x1]
            %v550 = vlaneseq
            %v551 = vshrl.u32 %v550, 7
            %v552 = vsub.s32 0, %v551
            %v553 = vrot.slane %v548, %v552
            %v556 = vsel %vm500, %v542, 0
            %v559 = vsel %vm500, %v543, 0
            %561 = vmatprep.subr.mxu0 0.0
            %562 = vmatpush1.msra.mxu0 %v544
            %563 = vmatprep.subr.mxu0 0.0
            %564 = vmatpush1.msra.mxu0 %v545
            %565 = vmatprep.subr.mxu0 0.0
            %566 = vmatpush1.msra.mxu0 %v546
            %567 = vmatprep.subr.mxu0 0.0
            %568 = vmatpush1.msra.mxu0 %v547
            %569 = vmatprep.subr.mxu0 0.0
            %570 = vmatpush1.msra.mxu0 0.0
            %571 = vmatprep.subr.mxu0 0.0
            %572 = vmatpush1.msra.mxu0 0.0
            %573 = vmatprep.subr.mxu0 0.0
            %574 = vmatpush1.msra.mxu0 0.0
            %575 = vmatprep.subr.mxu0 0.0
            %576 = vmatpush1.msra.mxu0 0.0
            %577 = vmatprep.subr.mxu0 0.0
            %578 = vmatpush1.msra.mxu0 0.0
            %579 = vmatprep.subr.mxu0 0.0
            %580 = vmatpush1.msra.mxu0 0.0
            %581 = vmatprep.subr.mxu0 0.0
            %582 = vmatpush1.msra.mxu0 0.0
            %583 = vmatprep.subr.mxu0 0.0
            %584 = vmatpush1.msra.mxu0 0.0
            %585 = vmatprep.subr.mxu0 0.0
            %586 = vmatpush1.msra.mxu0 0.0
            %587 = vmatprep.subr.mxu0 0.0
            %588 = vmatpush1.msra.mxu0 0.0
            %589 = vmatprep.subr.mxu0 0.0
            %590 = vmatpush1.msra.mxu0 0.0
            %591 = vmatprep.subr.mxu0 0.0
            %592 = vmatpush1.msra.mxu0 0.0
            %593 = vmatprep.subr.mxu0 0.0
            %594 = vmatpush1.msra.mxu0 0.0
            %595 = vmatprep.subr.mxu0 0.0
            %596 = vmatpush1.msra.mxu0 0.0
            %597 = vmatprep.subr.mxu0 0.0
            %598 = vmatpush1.msra.mxu0 0.0
            %599 = vmatprep.subr.mxu0 0.0
            %600 = vmatpush1.msra.mxu0 0.0
            %601 = vmatprep.subr.mxu0 0.0
            %602 = vmatpush1.msra.mxu0 0.0
            %603 = vmatprep.subr.mxu0 0.0
            %604 = vmatpush1.msra.mxu0 0.0
            %605 = vmatprep.subr.mxu0 0.0
            %606 = vmatpush1.msra.mxu0 0.0
            %607 = vmatprep.subr.mxu0 0.0
            %608 = vmatpush1.msra.mxu0 0.0
            %609 = vmatprep.subr.mxu0 0.0
            %610 = vmatpush1.msra.mxu0 0.0
            %611 = vmatprep.subr.mxu0 0.0
            %612 = vmatpush1.msra.mxu0 0.0
            %613 = vmatprep.subr.mxu0 0.0
            %614 = vmatpush1.msra.mxu0 0.0
            %615 = vmatprep.subr.mxu0 0.0
            %616 = vmatpush1.msra.mxu0 0.0
            %617 = vmatprep.subr.mxu0 0.0
            %618 = vmatpush1.msra.mxu0 0.0
            %619 = vmatprep.subr.mxu0 0.0
            %620 = vmatpush1.msra.mxu0 0.0
            %621 = vmatprep.subr.mxu0 0.0
            %622 = vmatpush1.msra.mxu0 0.0
            %623 = vmatprep.subr.mxu0 0.0
            %624 = vmatpush1.msra.mxu0 0.0
            %625 = vmatprep.mubr.f32.mxu0 0.0
            %626 = vmatmul.mubr.f32.gmra.mrb[0].mxu0 %v556
            %v627 = vpop.f32.mrb[0].mxu0
            %v628 = vadd.f32 %v553, %v627
            %v629 = vpop.f32.mrb[0].mxu0
            %630 = vmatprep.mubr.f32.mxu0 0.0
            %631 = vmatmul.mubr.f32.gmra.mrb[0].mxu0 %v559
            %v632 = vpop.f32.mrb[0].mxu0
            %v633 = vadd.f32 %v553, %v632
            %v634 = vpop.f32.mrb[0].mxu0
            %635 = vdwg.mxu0
            %v636 = vmul.f32 %v628, 0.35355338
            %v637 = vmul.f32 %v633, 0.35355338
            %s638 = scalar_lea.vmem [#allocation2], %s494
            %vm639 = vcmask 64512
            %640 = vst.msk [vmem:[%s638] sm:$0xff] %vm639, %v636
            %641 = vst.msk [vmem:[%s638 + $0x8] sm:$0xff] %vm639, %v637
            %644 = vrot.lane.b32.xlu0 %v628, 96
            %v645 = vpop.permute.xlu0 %644
            %646 = vrot.lane.b32.xlu0 %v633, 96
            %v647 = vpop.permute.xlu0 %646
            %s650 = scalar_lea.vmem [#allocation3], %s494
            %651 = vst.msk [vmem:[%s650] sm:$0xff] %vm639, %v645
            %652 = vst.msk [vmem:[%s650 + $0x8] sm:$0xff] %vm639, %v647
            %653 = vrot.lane.b32.xlu0 %v628, 64
            %v654 = vpop.permute.xlu0 %653
            %655 = vrot.lane.b32.xlu0 %v633, 64
            %v656 = vpop.permute.xlu0 %655
            %s659 = scalar_lea.vmem [#allocation4], %s494
            %660 = vst.msk [vmem:[%s659] sm:$0xff] %vm639, %v654
            %661 = vst.msk [vmem:[%s659 + $0x8] sm:$0xff] %vm639, %v656
            %664 = vrot.lane.b32.xlu0 %v636, 120
            %v665 = vpop.permute.xlu0 %664
            %666 = vrot.lane.b32.xlu0 %v637, 120
            %v667 = vpop.permute.xlu0 %666
            %s670 = sadd.s32 %s494, 32
            %s671 = scalar_lea.vmem [#allocation2], %s670
            %672 = vst.msk [vmem:[%s671] sm:$0xff] %vm639, %v665
            %673 = vst.msk [vmem:[%s671 + $0x8] sm:$0xff] %vm639, %v667
            %674 = vrot.lane.b32.xlu0 %v628, 88
            %v675 = vpop.permute.xlu0 %674
            %676 = vrot.lane.b32.xlu0 %v633, 88
            %v677 = vpop.permute.xlu0 %676
            %s680 = scalar_lea.vmem [#allocation3], %s670
            %681 = vst.msk [vmem:[%s680] sm:$0xff] %vm639, %v675
            %682 = vst.msk [vmem:[%s680 + $0x8] sm:$0xff] %vm639, %v677
            %683 = vrot.lane.b32.xlu0 %v628, 56
            %v684 = vpop.permute.xlu0 %683
            %685 = vrot.lane.b32.xlu0 %v633, 56
            %v686 = vpop.permute.xlu0 %685
            %s689 = scalar_lea.vmem [#allocation4], %s670
            %690 = vst.msk [vmem:[%s689] sm:$0xff] %vm639, %v684
            %691 = vst.msk [vmem:[%s689 + $0x8] sm:$0xff] %vm639, %v686
            %692 = vrot.lane.b32.xlu0 %v636, 112
            %v693 = vpop.permute.xlu0 %692
            %694 = vrot.lane.b32.xlu0 %v637, 112
            %v695 = vpop.permute.xlu0 %694
            %s698 = sadd.s32 %s494, 64
            %s699 = scalar_lea.vmem [#allocation2], %s698
            %700 = vst.msk [vmem:[%s699] sm:$0xff] %vm639, %v693
            %701 = vst.msk [vmem:[%s699 + $0x8] sm:$0xff] %vm639, %v695
            %702 = vrot.lane.b32.xlu0 %v628, 80
            %v703 = vpop.permute.xlu0 %702
            %704 = vrot.lane.b32.xlu0 %v633, 80
            %v705 = vpop.permute.xlu0 %704
            %s708 = scalar_lea.vmem [#allocation3], %s698
            %709 = vst.msk [vmem:[%s708] sm:$0xff] %vm639, %v703
            %710 = vst.msk [vmem:[%s708 + $0x8] sm:$0xff] %vm639, %v705
            %711 = vrot.lane.b32.xlu0 %v628, 48
            %v712 = vpop.permute.xlu0 %711
            %713 = vrot.lane.b32.xlu0 %v633, 48
            %v714 = vpop.permute.xlu0 %713
            %s717 = scalar_lea.vmem [#allocation4], %s698
            %718 = vst.msk [vmem:[%s717] sm:$0xff] %vm639, %v712
            %719 = vst.msk [vmem:[%s717 + $0x8] sm:$0xff] %vm639, %v714
            %720 = vrot.lane.b32.xlu0 %v636, 104
            %v721 = vpop.permute.xlu0 %720
            %722 = vrot.lane.b32.xlu0 %v637, 104
            %v723 = vpop.permute.xlu0 %722
            %s726 = sadd.s32 %s494, 96
            %s727 = scalar_lea.vmem [#allocation2], %s726
            %728 = vst.msk [vmem:[%s727] sm:$0xff] %vm639, %v721
            %729 = vst.msk [vmem:[%s727 + $0x8] sm:$0xff] %vm639, %v723
            %730 = vrot.lane.b32.xlu0 %v628, 72
            %v731 = vpop.permute.xlu0 %730
            %732 = vrot.lane.b32.xlu0 %v633, 72
            %v733 = vpop.permute.xlu0 %732
            %s736 = scalar_lea.vmem [#allocation3], %s726
            %737 = vst.msk [vmem:[%s736] sm:$0xff] %vm639, %v731
            %738 = vst.msk [vmem:[%s736 + $0x8] sm:$0xff] %vm639, %v733
            %739 = vrot.lane.b32.xlu0 %v628, 40
            %v740 = vpop.permute.xlu0 %739
            %741 = vrot.lane.b32.xlu0 %v633, 40
            %v742 = vpop.permute.xlu0 %741
            %s745 = scalar_lea.vmem [#allocation4], %s726
            %746 = vst.msk [vmem:[%s745] sm:$0xff] %vm639, %v740
            %747 = vst.msk [vmem:[%s745 + $0x8] sm:$0xff] %vm639, %v742
          $region89: #{tpu_custom_call.1} parent=83 // loop_footer
            %s493 = sadd.s32 1, %s489
          $region90: #{tpu_custom_call.1} parent=83 // loop_footer_branch
            %488 = sbr.rel target = $region86
          $region91: #{tpu_custom_call.1} parent=83 // loop_exit
            _
        $region84: #{tpu_custom_call.1} parent=71 // pred_fallthru
          _
        %s748 = smul.u32 %s34, 16
        %s749 = scalar_lea.vmem %s482, %s748
        %v750 = vld [vmem:[%s749] sm:$0xff]
        %v751 = vld [vmem:[%s749 + $0x8] sm:$0xff]
        %s752 = scalar_lea.vmem [#allocation2], %s748
        %v753 = vld [vmem:[%s752] sm:$0xff]
        %v754 = vld [vmem:[%s752 + $0x8] sm:$0xff]
        %v755 = vld [vmem:[%s752 + $0x20] sm:$0xff]
        %v756 = vld [vmem:[%s752 + $0x28] sm:$0xff]
        %v757 = vld [vmem:[%s752 + $0x40] sm:$0xff]
        %v758 = vld [vmem:[%s752 + $0x48] sm:$0xff]
        %v759 = vld [vmem:[%s752 + $0x60] sm:$0xff]
        %v760 = vld [vmem:[%s752 + $0x68] sm:$0xff]
        %v761 = vld [vmem:[#allocation3] sm:$0xff]
        %v762 = vld [vmem:[#allocation3 + $0x8] sm:$0xff]
        %v763 = vld [vmem:[#allocation3 + $0x10] sm:$0xff]
        %v764 = vld [vmem:[#allocation3 + $0x18] sm:$0xff]
        %v765 = vld [vmem:[#allocation3 + $0x20] sm:$0xff]
        %v766 = vld [vmem:[#allocation3 + $0x28] sm:$0xff]
        %v767 = vld [vmem:[#allocation3 + $0x30] sm:$0xff]
        %v768 = vld [vmem:[#allocation3 + $0x38] sm:$0xff]
        %v769 = vld [vmem:[#allocation3 + $0x40] sm:$0xff]
        %v770 = vld [vmem:[#allocation3 + $0x48] sm:$0xff]
        %v771 = vld [vmem:[#allocation3 + $0x50] sm:$0xff]
        %v772 = vld [vmem:[#allocation3 + $0x58] sm:$0xff]
        %v773 = vld [vmem:[#allocation3 + $0x60] sm:$0xff]
        %v774 = vld [vmem:[#allocation3 + $0x68] sm:$0xff]
        %v775 = vld [vmem:[#allocation3 + $0x70] sm:$0xff]
        %v776 = vld [vmem:[#allocation3 + $0x78] sm:$0xff]
        %v777 = vld [vmem:[#allocation4] sm:$0xff]
        %v778 = vld [vmem:[#allocation4 + $0x8] sm:$0xff]
        %v779 = vld [vmem:[#allocation4 + $0x10] sm:$0xff]
        %v780 = vld [vmem:[#allocation4 + $0x18] sm:$0xff]
        %v781 = vld [vmem:[#allocation4 + $0x20] sm:$0xff]
        %v782 = vld [vmem:[#allocation4 + $0x28] sm:$0xff]
        %v783 = vld [vmem:[#allocation4 + $0x30] sm:$0xff]
        %v784 = vld [vmem:[#allocation4 + $0x38] sm:$0xff]
        %v785 = vld [vmem:[#allocation4 + $0x40] sm:$0xff]
        %v786 = vld [vmem:[#allocation4 + $0x48] sm:$0xff]
        %v787 = vld [vmem:[#allocation4 + $0x50] sm:$0xff]
        %v788 = vld [vmem:[#allocation4 + $0x58] sm:$0xff]
        %v789 = vld [vmem:[#allocation4 + $0x60] sm:$0xff]
        %v790 = vld [vmem:[#allocation4 + $0x68] sm:$0xff]
        %v791 = vld [vmem:[#allocation4 + $0x70] sm:$0xff]
        %v792 = vld [vmem:[#allocation4 + $0x78] sm:$0xff]
        %vm793 = vcmask 64512
        %v795 = vsel %vm793, %v753, 0
        %v798 = vsel %vm793, %v754, 0
        %v801 = vsel %vm793, %v761, 0
        %v804 = vsel %vm793, %v762, 0
        %v807 = vsel %vm793, %v763, 0
        %v810 = vsel %vm793, %v764, 0
        %812 = vmatprep.subr.mxu0 0.0
        %813 = vmatpush1.xpose.msra.mxu0 %v801
        %814 = vmatprep.subr.mxu0 0.0
        %815 = vmatpush1.xpose.msra.mxu0 %v804
        %816 = vmatprep.subr.mxu0 0.0
        %817 = vmatpush1.xpose.msra.mxu0 %v807
        %818 = vmatprep.subr.mxu0 0.0
        %819 = vmatpush1.xpose.msra.mxu0 %v810
        %820 = vmatprep.subr.mxu0 0.0
        %821 = vmatpush1.xpose.msra.mxu0 0.0
        %822 = vmatprep.subr.mxu0 0.0
        %823 = vmatpush1.xpose.msra.mxu0 0.0
        %824 = vmatprep.subr.mxu0 0.0
        %825 = vmatpush1.xpose.msra.mxu0 0.0
        %826 = vmatprep.subr.mxu0 0.0
        %827 = vmatpush1.xpose.msra.mxu0 0.0
        %828 = vmatprep.subr.mxu0 0.0
        %829 = vmatpush1.xpose.msra.mxu0 0.0
        %830 = vmatprep.subr.mxu0 0.0
        %831 = vmatpush1.xpose.msra.mxu0 0.0
        %832 = vmatprep.subr.mxu0 0.0
        %833 = vmatpush1.xpose.msra.mxu0 0.0
        %834 = vmatprep.subr.mxu0 0.0
        %835 = vmatpush1.xpose.msra.mxu0 0.0
        %836 = vmatprep.subr.mxu0 0.0
        %837 = vmatpush1.xpose.msra.mxu0 0.0
        %838 = vmatprep.subr.mxu0 0.0
        %839 = vmatpush1.xpose.msra.mxu0 0.0
        %840 = vmatprep.subr.mxu0 0.0
        %841 = vmatpush1.xpose.msra.mxu0 0.0
        %842 = vmatprep.subr.mxu0 0.0
        %843 = vmatpush1.xpose.msra.mxu0 0.0
        %844 = vmatprep.subr.mxu0 0.0
        %845 = vmatpush1.xpose.msra.mxu0 0.0
        %846 = vmatprep.subr.mxu0 0.0
        %847 = vmatpush1.xpose.msra.mxu0 0.0
        %848 = vmatprep.subr.mxu0 0.0
        %849 = vmatpush1.xpose.msra.mxu0 0.0
        %850 = vmatprep.subr.mxu0 0.0
        %851 = vmatpush1.xpose.msra.mxu0 0.0
        %852 = vmatprep.subr.mxu0 0.0
        %853 = vmatpush1.xpose.msra.mxu0 0.0
        %854 = vmatprep.subr.mxu0 0.0
        %855 = vmatpush1.xpose.msra.mxu0 0.0
        %856 = vmatprep.subr.mxu0 0.0
        %857 = vmatpush1.xpose.msra.mxu0 0.0
        %858 = vmatprep.subr.mxu0 0.0
        %859 = vmatpush1.xpose.msra.mxu0 0.0
        %860 = vmatprep.subr.mxu0 0.0
        %861 = vmatpush1.xpose.msra.mxu0 0.0
        %862 = vmatprep.subr.mxu0 0.0
        %863 = vmatpush1.xpose.msra.mxu0 0.0
        %864 = vmatprep.subr.mxu0 0.0
        %865 = vmatpush1.xpose.msra.mxu0 0.0
        %866 = vmatprep.subr.mxu0 0.0
        %867 = vmatpush1.xpose.msra.mxu0 0.0
        %868 = vmatprep.subr.mxu0 0.0
        %869 = vmatpush1.xpose.msra.mxu0 0.0
        %870 = vmatprep.subr.mxu0 0.0
        %871 = vmatpush1.xpose.msra.mxu0 0.0
        %872 = vmatprep.subr.mxu0 0.0
        %873 = vmatpush1.xpose.msra.mxu0 0.0
        %874 = vmatprep.subr.mxu0 0.0
        %875 = vmatpush1.xpose.msra.mxu0 0.0
        %876 = vmatprep.mubr.f32.mxu0 0.0
        %877 = vmatmul.mubr.f32.gmra.mrb[0].mxu0 %v795
        %v878 = vpop.f32.mrb[0].mxu0
        %v879 = vadd.f32 0.0, %v878
        %v880 = vpop.f32.mrb[0].mxu0
        %881 = vmatprep.mubr.f32.mxu0 0.0
        %882 = vmatmul.mubr.f32.gmra.mrb[0].mxu0 %v798
        %v883 = vpop.f32.mrb[0].mxu0
        %v884 = vadd.f32 0.0, %v883
        %v885 = vpop.f32.mrb[0].mxu0
        %886 = vdwg.mxu0
        %v888 = vsel %vm793, %v755, 0
        %v891 = vsel %vm793, %v756, 0
        %v894 = vsel %vm793, %v765, 0
        %v897 = vsel %vm793, %v766, 0
        %v900 = vsel %vm793, %v767, 0
        %v903 = vsel %vm793, %v768, 0
        %905 = vmatprep.subr.mxu0 0.0
        %906 = vmatpush1.xpose.msra.mxu0 %v894
        %907 = vmatprep.subr.mxu0 0.0
        %908 = vmatpush1.xpose.msra.mxu0 %v897
        %909 = vmatprep.subr.mxu0 0.0
        %910 = vmatpush1.xpose.msra.mxu0 %v900
        %911 = vmatprep.subr.mxu0 0.0
        %912 = vmatpush1.xpose.msra.mxu0 %v903
        %913 = vmatprep.subr.mxu0 0.0
        %914 = vmatpush1.xpose.msra.mxu0 0.0
        %915 = vmatprep.subr.mxu0 0.0
        %916 = vmatpush1.xpose.msra.mxu0 0.0
        %917 = vmatprep.subr.mxu0 0.0
        %918 = vmatpush1.xpose.msra.mxu0 0.0
        %919 = vmatprep.subr.mxu0 0.0
        %920 = vmatpush1.xpose.msra.mxu0 0.0
        %921 = vmatprep.subr.mxu0 0.0
        %922 = vmatpush1.xpose.msra.mxu0 0.0
        %923 = vmatprep.subr.mxu0 0.0
        %924 = vmatpush1.xpose.msra.mxu0 0.0
        %925 = vmatprep.subr.mxu0 0.0
        %926 = vmatpush1.xpose.msra.mxu0 0.0
        %927 = vmatprep.subr.mxu0 0.0
        %928 = vmatpush1.xpose.msra.mxu0 0.0
        %929 = vmatprep.subr.mxu0 0.0
        %930 = vmatpush1.xpose.msra.mxu0 0.0
        %931 = vmatprep.subr.mxu0 0.0
        %932 = vmatpush1.xpose.msra.mxu0 0.0
        %933 = vmatprep.subr.mxu0 0.0
        %934 = vmatpush1.xpose.msra.mxu0 0.0
        %935 = vmatprep.subr.mxu0 0.0
        %936 = vmatpush1.xpose.msra.mxu0 0.0
        %937 = vmatprep.subr.mxu0 0.0
        %938 = vmatpush1.xpose.msra.mxu0 0.0
        %939 = vmatprep.subr.mxu0 0.0
        %940 = vmatpush1.xpose.msra.mxu0 0.0
        %941 = vmatprep.subr.mxu0 0.0
        %942 = vmatpush1.xpose.msra.mxu0 0.0
        %943 = vmatprep.subr.mxu0 0.0
        %944 = vmatpush1.xpose.msra.mxu0 0.0
        %945 = vmatprep.subr.mxu0 0.0
        %946 = vmatpush1.xpose.msra.mxu0 0.0
        %947 = vmatprep.subr.mxu0 0.0
        %948 = vmatpush1.xpose.msra.mxu0 0.0
        %949 = vmatprep.subr.mxu0 0.0
        %950 = vmatpush1.xpose.msra.mxu0 0.0
        %951 = vmatprep.subr.mxu0 0.0
        %952 = vmatpush1.xpose.msra.mxu0 0.0
        %953 = vmatprep.subr.mxu0 0.0
        %954 = vmatpush1.xpose.msra.mxu0 0.0
        %955 = vmatprep.subr.mxu0 0.0
        %956 = vmatpush1.xpose.msra.mxu0 0.0
        %957 = vmatprep.subr.mxu0 0.0
        %958 = vmatpush1.xpose.msra.mxu0 0.0
        %959 = vmatprep.subr.mxu0 0.0
        %960 = vmatpush1.xpose.msra.mxu0 0.0
        %961 = vmatprep.subr.mxu0 0.0
        %962 = vmatpush1.xpose.msra.mxu0 0.0
        %963 = vmatprep.subr.mxu0 0.0
        %964 = vmatpush1.xpose.msra.mxu0 0.0
        %965 = vmatprep.subr.mxu0 0.0
        %966 = vmatpush1.xpose.msra.mxu0 0.0
        %967 = vmatprep.subr.mxu0 0.0
        %968 = vmatpush1.xpose.msra.mxu0 0.0
        %969 = vmatprep.mubr.f32.mxu0 0.0
        %970 = vmatmul.mubr.f32.gmra.mrb[0].mxu0 %v888
        %v971 = vpop.f32.mrb[0].mxu0
        %v972 = vadd.f32 0.0, %v971
        %v973 = vpop.f32.mrb[0].mxu0
        %974 = vmatprep.mubr.f32.mxu0 0.0
        %975 = vmatmul.mubr.f32.gmra.mrb[0].mxu0 %v891
        %v976 = vpop.f32.mrb[0].mxu0
        %v977 = vadd.f32 0.0, %v976
        %v978 = vpop.f32.mrb[0].mxu0
        %979 = vdwg.mxu0
        %v981 = vsel %vm793, %v757, 0
        %v984 = vsel %vm793, %v758, 0
        %v987 = vsel %vm793, %v769, 0
        %v990 = vsel %vm793, %v770, 0
        %v993 = vsel %vm793, %v771, 0
        %v996 = vsel %vm793, %v772, 0
        %998 = vmatprep.subr.mxu0 0.0
        %999 = vmatpush1.xpose.msra.mxu0 %v987
        %1000 = vmatprep.subr.mxu0 0.0
        %1001 = vmatpush1.xpose.msra.mxu0 %v990
        %1002 = vmatprep.subr.mxu0 0.0
        %1003 = vmatpush1.xpose.msra.mxu0 %v993
        %1004 = vmatprep.subr.mxu0 0.0
        %1005 = vmatpush1.xpose.msra.mxu0 %v996
        %1006 = vmatprep.subr.mxu0 0.0
        %1007 = vmatpush1.xpose.msra.mxu0 0.0
        %1008 = vmatprep.subr.mxu0 0.0
        %1009 = vmatpush1.xpose.msra.mxu0 0.0
        %1010 = vmatprep.subr.mxu0 0.0
        %1011 = vmatpush1.xpose.msra.mxu0 0.0
        %1012 = vmatprep.subr.mxu0 0.0
        %1013 = vmatpush1.xpose.msra.mxu0 0.0
        %1014 = vmatprep.subr.mxu0 0.0
        %1015 = vmatpush1.xpose.msra.mxu0 0.0
        %1016 = vmatprep.subr.mxu0 0.0
        %1017 = vmatpush1.xpose.msra.mxu0 0.0
        %1018 = vmatprep.subr.mxu0 0.0
        %1019 = vmatpush1.xpose.msra.mxu0 0.0
        %1020 = vmatprep.subr.mxu0 0.0
        %1021 = vmatpush1.xpose.msra.mxu0 0.0
        %1022 = vmatprep.subr.mxu0 0.0
        %1023 = vmatpush1.xpose.msra.mxu0 0.0
        %1024 = vmatprep.subr.mxu0 0.0
        %1025 = vmatpush1.xpose.msra.mxu0 0.0
        %1026 = vmatprep.subr.mxu0 0.0
        %1027 = vmatpush1.xpose.msra.mxu0 0.0
        %1028 = vmatprep.subr.mxu0 0.0
        %1029 = vmatpush1.xpose.msra.mxu0 0.0
        %1030 = vmatprep.subr.mxu0 0.0
        %1031 = vmatpush1.xpose.msra.mxu0 0.0
        %1032 = vmatprep.subr.mxu0 0.0
        %1033 = vmatpush1.xpose.msra.mxu0 0.0
        %1034 = vmatprep.subr.mxu0 0.0
        %1035 = vmatpush1.xpose.msra.mxu0 0.0
        %1036 = vmatprep.subr.mxu0 0.0
        %1037 = vmatpush1.xpose.msra.mxu0 0.0
        %1038 = vmatprep.subr.mxu0 0.0
        %1039 = vmatpush1.xpose.msra.mxu0 0.0
        %1040 = vmatprep.subr.mxu0 0.0
        %1041 = vmatpush1.xpose.msra.mxu0 0.0
        %1042 = vmatprep.subr.mxu0 0.0
        %1043 = vmatpush1.xpose.msra.mxu0 0.0
        %1044 = vmatprep.subr.mxu0 0.0
        %1045 = vmatpush1.xpose.msra.mxu0 0.0
        %1046 = vmatprep.subr.mxu0 0.0
        %1047 = vmatpush1.xpose.msra.mxu0 0.0
        %1048 = vmatprep.subr.mxu0 0.0
        %1049 = vmatpush1.xpose.msra.mxu0 0.0
        %1050 = vmatprep.subr.mxu0 0.0
        %1051 = vmatpush1.xpose.msra.mxu0 0.0
        %1052 = vmatprep.subr.mxu0 0.0
        %1053 = vmatpush1.xpose.msra.mxu0 0.0
        %1054 = vmatprep.subr.mxu0 0.0
        %1055 = vmatpush1.xpose.msra.mxu0 0.0
        %1056 = vmatprep.subr.mxu0 0.0
        %1057 = vmatpush1.xpose.msra.mxu0 0.0
        %1058 = vmatprep.subr.mxu0 0.0
        %1059 = vmatpush1.xpose.msra.mxu0 0.0
        %1060 = vmatprep.subr.mxu0 0.0
        %1061 = vmatpush1.xpose.msra.mxu0 0.0
        %1062 = vmatprep.mubr.f32.mxu0 0.0
        %1063 = vmatmul.mubr.f32.gmra.mrb[0].mxu0 %v981
        %v1064 = vpop.f32.mrb[0].mxu0
        %v1065 = vadd.f32 0.0, %v1064
        %v1066 = vpop.f32.mrb[0].mxu0
        %1067 = vmatprep.mubr.f32.mxu0 0.0
        %1068 = vmatmul.mubr.f32.gmra.mrb[0].mxu0 %v984
        %v1069 = vpop.f32.mrb[0].mxu0
        %v1070 = vadd.f32 0.0, %v1069
        %v1071 = vpop.f32.mrb[0].mxu0
        %1072 = vdwg.mxu0
        %v1074 = vsel %vm793, %v759, 0
        %v1077 = vsel %vm793, %v760, 0
        %v1080 = vsel %vm793, %v773, 0
        %v1083 = vsel %vm793, %v774, 0
        %v1086 = vsel %vm793, %v775, 0
        %v1089 = vsel %vm793, %v776, 0
        %1091 = vmatprep.subr.mxu0 0.0
        %1092 = vmatpush1.xpose.msra.mxu0 %v1080
        %1093 = vmatprep.subr.mxu0 0.0
        %1094 = vmatpush1.xpose.msra.mxu0 %v1083
        %1095 = vmatprep.subr.mxu0 0.0
        %1096 = vmatpush1.xpose.msra.mxu0 %v1086
        %1097 = vmatprep.subr.mxu0 0.0
        %1098 = vmatpush1.xpose.msra.mxu0 %v1089
        %1099 = vmatprep.subr.mxu0 0.0
        %1100 = vmatpush1.xpose.msra.mxu0 0.0
        %1101 = vmatprep.subr.mxu0 0.0
        %1102 = vmatpush1.xpose.msra.mxu0 0.0
        %1103 = vmatprep.subr.mxu0 0.0
        %1104 = vmatpush1.xpose.msra.mxu0 0.0
        %1105 = vmatprep.subr.mxu0 0.0
        %1106 = vmatpush1.xpose.msra.mxu0 0.0
        %1107 = vmatprep.subr.mxu0 0.0
        %1108 = vmatpush1.xpose.msra.mxu0 0.0
        %1109 = vmatprep.subr.mxu0 0.0
        %1110 = vmatpush1.xpose.msra.mxu0 0.0
        %1111 = vmatprep.subr.mxu0 0.0
        %1112 = vmatpush1.xpose.msra.mxu0 0.0
        %1113 = vmatprep.subr.mxu0 0.0
        %1114 = vmatpush1.xpose.msra.mxu0 0.0
        %1115 = vmatprep.subr.mxu0 0.0
        %1116 = vmatpush1.xpose.msra.mxu0 0.0
        %1117 = vmatprep.subr.mxu0 0.0
        %1118 = vmatpush1.xpose.msra.mxu0 0.0
        %1119 = vmatprep.subr.mxu0 0.0
        %1120 = vmatpush1.xpose.msra.mxu0 0.0
        %1121 = vmatprep.subr.mxu0 0.0
        %1122 = vmatpush1.xpose.msra.mxu0 0.0
        %1123 = vmatprep.subr.mxu0 0.0
        %1124 = vmatpush1.xpose.msra.mxu0 0.0
        %1125 = vmatprep.subr.mxu0 0.0
        %1126 = vmatpush1.xpose.msra.mxu0 0.0
        %1127 = vmatprep.subr.mxu0 0.0
        %1128 = vmatpush1.xpose.msra.mxu0 0.0
        %1129 = vmatprep.subr.mxu0 0.0
        %1130 = vmatpush1.xpose.msra.mxu0 0.0
        %1131 = vmatprep.subr.mxu0 0.0
        %1132 = vmatpush1.xpose.msra.mxu0 0.0
        %1133 = vmatprep.subr.mxu0 0.0
        %1134 = vmatpush1.xpose.msra.mxu0 0.0
        %1135 = vmatprep.subr.mxu0 0.0
        %1136 = vmatpush1.xpose.msra.mxu0 0.0
        %1137 = vmatprep.subr.mxu0 0.0
        %1138 = vmatpush1.xpose.msra.mxu0 0.0
        %1139 = vmatprep.subr.mxu0 0.0
        %1140 = vmatpush1.xpose.msra.mxu0 0.0
        %1141 = vmatprep.subr.mxu0 0.0
        %1142 = vmatpush1.xpose.msra.mxu0 0.0
        %1143 = vmatprep.subr.mxu0 0.0
        %1144 = vmatpush1.xpose.msra.mxu0 0.0
        %1145 = vmatprep.subr.mxu0 0.0
        %1146 = vmatpush1.xpose.msra.mxu0 0.0
        %1147 = vmatprep.subr.mxu0 0.0
        %1148 = vmatpush1.xpose.msra.mxu0 0.0
        %1149 = vmatprep.subr.mxu0 0.0
        %1150 = vmatpush1.xpose.msra.mxu0 0.0
        %1151 = vmatprep.subr.mxu0 0.0
        %1152 = vmatpush1.xpose.msra.mxu0 0.0
        %1153 = vmatprep.subr.mxu0 0.0
        %1154 = vmatpush1.xpose.msra.mxu0 0.0
        %1155 = vmatprep.mubr.f32.mxu0 0.0
        %1156 = vmatmul.mubr.f32.gmra.mrb[0].mxu0 %v1074
        %v1157 = vpop.f32.mrb[0].mxu0
        %v1158 = vadd.f32 0.0, %v1157
        %v1159 = vpop.f32.mrb[0].mxu0
        %1160 = vmatprep.mubr.f32.mxu0 0.0
        %1161 = vmatmul.mubr.f32.gmra.mrb[0].mxu0 %v1077
        %v1162 = vpop.f32.mrb[0].mxu0
        %v1163 = vadd.f32 0.0, %v1162
        %v1164 = vpop.f32.mrb[0].mxu0
        %1165 = vdwg.mxu0
        %vm1166 = vcmask 261120
        %v1167 = vsel %vm1166, %v879, -inf
        %1168 = vmax.xlane.f32.xlu0 %v1167
        %v1169 = vpop.xlane.xlu0 %1168
        %v1170 = vsel %vm1166, %v884, -inf
        %1171 = vmax.xlane.f32.xlu0 %v1170
        %v1172 = vpop.xlane.xlu0 %1171
        %v1173 = vsel %vm1166, %v972, -inf
        %1174 = vmax.xlane.f32.xlu0 %v1173
        %v1175 = vpop.xlane.xlu0 %1174
        %v1176 = vsel %vm1166, %v977, -inf
        %1177 = vmax.xlane.f32.xlu0 %v1176
        %v1178 = vpop.xlane.xlu0 %1177
        %v1179 = vsel %vm1166, %v1065, -inf
        %1180 = vmax.xlane.f32.xlu0 %v1179
        %v1181 = vpop.xlane.xlu0 %1180
        %v1182 = vsel %vm1166, %v1070, -inf
        %1183 = vmax.xlane.f32.xlu0 %v1182
        %v1184 = vpop.xlane.xlu0 %1183
        %v1185 = vsel %vm1166, %v1158, -inf
        %1186 = vmax.xlane.f32.xlu0 %v1185
        %v1187 = vpop.xlane.xlu0 %1186
        %v1188 = vsel %vm1166, %v1163, -inf
        %1189 = vmax.xlane.f32.xlu0 %v1188
        %v1190 = vpop.xlane.xlu0 %1189
        %v1191 = vsub.f32 %v879, %v1169
        %v1192 = vsub.f32 %v884, %v1172
        %v1193 = vsub.f32 %v972, %v1175
        %v1194 = vsub.f32 %v977, %v1178
        %v1195 = vsub.f32 %v1065, %v1181
        %v1196 = vsub.f32 %v1070, %v1184
        %v1197 = vsub.f32 %v1158, %v1187
        %v1198 = vsub.f32 %v1163, %v1190
        %v1199 = vmul.f32 %v1191, 1.442695
        %v1200 = vpow.pop %v1199
        %v1201 = vmul.f32 %v1192, 1.442695
        %v1202 = vpow.pop %v1201
        %v1203 = vmul.f32 %v1193, 1.442695
        %v1204 = vpow.pop %v1203
        %v1205 = vmul.f32 %v1194, 1.442695
        %v1206 = vpow.pop %v1205
        %v1207 = vmul.f32 %v1195, 1.442695
        %v1208 = vpow.pop %v1207
        %v1209 = vmul.f32 %v1196, 1.442695
        %v1210 = vpow.pop %v1209
        %v1211 = vmul.f32 %v1197, 1.442695
        %v1212 = vpow.pop %v1211
        %v1213 = vmul.f32 %v1198, 1.442695
        %v1214 = vpow.pop %v1213
        %v1215 = vsel %vm1166, %v1200, 0.0
        %1216 = vadd.xlane.f32.xlu0 %v1215
        %v1217 = vpop.xlane.xlu0 %1216
        %v1218 = vsel %vm1166, %v1202, 0.0
        %1219 = vadd.xlane.f32.xlu0 %v1218
        %v1220 = vpop.xlane.xlu0 %1219
        %v1221 = vsel %vm1166, %v1204, 0.0
        %1222 = vadd.xlane.f32.xlu0 %v1221
        %v1223 = vpop.xlane.xlu0 %1222
        %v1224 = vsel %vm1166, %v1206, 0.0
        %1225 = vadd.xlane.f32.xlu0 %v1224
        %v1226 = vpop.xlane.xlu0 %1225
        %v1227 = vsel %vm1166, %v1208, 0.0
        %1228 = vadd.xlane.f32.xlu0 %v1227
        %v1229 = vpop.xlane.xlu0 %1228
        %v1230 = vsel %vm1166, %v1210, 0.0
        %1231 = vadd.xlane.f32.xlu0 %v1230
        %v1232 = vpop.xlane.xlu0 %1231
        %v1233 = vsel %vm1166, %v1212, 0.0
        %1234 = vadd.xlane.f32.xlu0 %v1233
        %v1235 = vpop.xlane.xlu0 %1234
        %v1236 = vsel %vm1166, %v1214, 0.0
        %1237 = vadd.xlane.f32.xlu0 %v1236
        %v1238 = vpop.xlane.xlu0 %1237
        %v1239 = vrcp.pop %v1217
        %v1240 = vrcp.pop %v1220
        %v1241 = vrcp.pop %v1223
        %v1242 = vrcp.pop %v1226
        %v1243 = vrcp.pop %v1229
        %v1244 = vrcp.pop %v1232
        %v1245 = vrcp.pop %v1235
        %v1246 = vrcp.pop %v1238
        %v1247 = vmul.f32 %v1200, %v1239
        %v1248 = vmul.f32 %v1202, %v1240
        %v1249 = vmul.f32 %v1204, %v1241
        %v1250 = vmul.f32 %v1206, %v1242
        %v1251 = vmul.f32 %v1208, %v1243
        %v1252 = vmul.f32 %v1210, %v1244
        %v1253 = vmul.f32 %v1212, %v1245
        %v1254 = vmul.f32 %v1214, %v1246
        %v1256 = vsel %vm1166, %v1247, 0
        %v1259 = vsel %vm1166, %v1248, 0
        %1261 = vmatprep.subr.mxu0 0.0
        %1262 = vmatpush1.msra.mxu0 %v777
        %1263 = vmatprep.subr.mxu0 0.0
        %1264 = vmatpush1.msra.mxu0 %v778
        %1265 = vmatprep.subr.mxu0 0.0
        %1266 = vmatpush1.msra.mxu0 %v779
        %1267 = vmatprep.subr.mxu0 0.0
        %1268 = vmatpush1.msra.mxu0 %v780
        %1269 = vmatprep.subr.mxu0 0.0
        %1270 = vmatpush1.msra.mxu0 0.0
        %1271 = vmatprep.subr.mxu0 0.0
        %1272 = vmatpush1.msra.mxu0 0.0
        %1273 = vmatprep.subr.mxu0 0.0
        %1274 = vmatpush1.msra.mxu0 0.0
        %1275 = vmatprep.subr.mxu0 0.0
        %1276 = vmatpush1.msra.mxu0 0.0
        %1277 = vmatprep.subr.mxu0 0.0
        %1278 = vmatpush1.msra.mxu0 0.0
        %1279 = vmatprep.subr.mxu0 0.0
        %1280 = vmatpush1.msra.mxu0 0.0
        %1281 = vmatprep.subr.mxu0 0.0
        %1282 = vmatpush1.msra.mxu0 0.0
        %1283 = vmatprep.subr.mxu0 0.0
        %1284 = vmatpush1.msra.mxu0 0.0
        %1285 = vmatprep.subr.mxu0 0.0
        %1286 = vmatpush1.msra.mxu0 0.0
        %1287 = vmatprep.subr.mxu0 0.0
        %1288 = vmatpush1.msra.mxu0 0.0
        %1289 = vmatprep.subr.mxu0 0.0
        %1290 = vmatpush1.msra.mxu0 0.0
        %1291 = vmatprep.subr.mxu0 0.0
        %1292 = vmatpush1.msra.mxu0 0.0
        %1293 = vmatprep.subr.mxu0 0.0
        %1294 = vmatpush1.msra.mxu0 0.0
        %1295 = vmatprep.subr.mxu0 0.0
        %1296 = vmatpush1.msra.mxu0 0.0
        %1297 = vmatprep.subr.mxu0 0.0
        %1298 = vmatpush1.msra.mxu0 0.0
        %1299 = vmatprep.subr.mxu0 0.0
        %1300 = vmatpush1.msra.mxu0 0.0
        %1301 = vmatprep.subr.mxu0 0.0
        %1302 = vmatpush1.msra.mxu0 0.0
        %1303 = vmatprep.subr.mxu0 0.0
        %1304 = vmatpush1.msra.mxu0 0.0
        %1305 = vmatprep.subr.mxu0 0.0
        %1306 = vmatpush1.msra.mxu0 0.0
        %1307 = vmatprep.subr.mxu0 0.0
        %1308 = vmatpush1.msra.mxu0 0.0
        %1309 = vmatprep.subr.mxu0 0.0
        %1310 = vmatpush1.msra.mxu0 0.0
        %1311 = vmatprep.subr.mxu0 0.0
        %1312 = vmatpush1.msra.mxu0 0.0
        %1313 = vmatprep.subr.mxu0 0.0
        %1314 = vmatpush1.msra.mxu0 0.0
        %1315 = vmatprep.subr.mxu0 0.0
        %1316 = vmatpush1.msra.mxu0 0.0
        %1317 = vmatprep.subr.mxu0 0.0
        %1318 = vmatpush1.msra.mxu0 0.0
        %1319 = vmatprep.subr.mxu0 0.0
        %1320 = vmatpush1.msra.mxu0 0.0
        %1321 = vmatprep.subr.mxu0 0.0
        %1322 = vmatpush1.msra.mxu0 0.0
        %1323 = vmatprep.subr.mxu0 0.0
        %1324 = vmatpush1.msra.mxu0 0.0
        %1325 = vmatprep.mubr.f32.mxu0 0.0
        %1326 = vmatmul.mubr.f32.gmra.mrb[0].mxu0 %v1256
        %v1327 = vpop.f32.mrb[0].mxu0
        %v1328 = vadd.f32 0.0, %v1327
        %v1329 = vpop.f32.mrb[0].mxu0
        %1330 = vmatprep.mubr.f32.mxu0 0.0
        %1331 = vmatmul.mubr.f32.gmra.mrb[0].mxu0 %v1259
        %v1332 = vpop.f32.mrb[0].mxu0
        %v1333 = vadd.f32 0.0, %v1332
        %v1334 = vpop.f32.mrb[0].mxu0
        %1335 = vdwg.mxu0
        %v1337 = vsel %vm1166, %v1249, 0
        %v1340 = vsel %vm1166, %v1250, 0
        %1342 = vmatprep.subr.mxu0 0.0
        %1343 = vmatpush1.msra.mxu0 %v781
        %1344 = vmatprep.subr.mxu0 0.0
        %1345 = vmatpush1.msra.mxu0 %v782
        %1346 = vmatprep.subr.mxu0 0.0
        %1347 = vmatpush1.msra.mxu0 %v783
        %1348 = vmatprep.subr.mxu0 0.0
        %1349 = vmatpush1.msra.mxu0 %v784
        %1350 = vmatprep.subr.mxu0 0.0
        %1351 = vmatpush1.msra.mxu0 0.0
        %1352 = vmatprep.subr.mxu0 0.0
        %1353 = vmatpush1.msra.mxu0 0.0
        %1354 = vmatprep.subr.mxu0 0.0
        %1355 = vmatpush1.msra.mxu0 0.0
        %1356 = vmatprep.subr.mxu0 0.0
        %1357 = vmatpush1.msra.mxu0 0.0
        %1358 = vmatprep.subr.mxu0 0.0
        %1359 = vmatpush1.msra.mxu0 0.0
        %1360 = vmatprep.subr.mxu0 0.0
        %1361 = vmatpush1.msra.mxu0 0.0
        %1362 = vmatprep.subr.mxu0 0.0
        %1363 = vmatpush1.msra.mxu0 0.0
        %1364 = vmatprep.subr.mxu0 0.0
        %1365 = vmatpush1.msra.mxu0 0.0
        %1366 = vmatprep.subr.mxu0 0.0
        %1367 = vmatpush1.msra.mxu0 0.0
        %1368 = vmatprep.subr.mxu0 0.0
        %1369 = vmatpush1.msra.mxu0 0.0
        %1370 = vmatprep.subr.mxu0 0.0
        %1371 = vmatpush1.msra.mxu0 0.0
        %1372 = vmatprep.subr.mxu0 0.0
        %1373 = vmatpush1.msra.mxu0 0.0
        %1374 = vmatprep.subr.mxu0 0.0
        %1375 = vmatpush1.msra.mxu0 0.0
        %1376 = vmatprep.subr.mxu0 0.0
        %1377 = vmatpush1.msra.mxu0 0.0
        %1378 = vmatprep.subr.mxu0 0.0
        %1379 = vmatpush1.msra.mxu0 0.0
        %1380 = vmatprep.subr.mxu0 0.0
        %1381 = vmatpush1.msra.mxu0 0.0
        %1382 = vmatprep.subr.mxu0 0.0
        %1383 = vmatpush1.msra.mxu0 0.0
        %1384 = vmatprep.subr.mxu0 0.0
        %1385 = vmatpush1.msra.mxu0 0.0
        %1386 = vmatprep.subr.mxu0 0.0
        %1387 = vmatpush1.msra.mxu0 0.0
        %1388 = vmatprep.subr.mxu0 0.0
        %1389 = vmatpush1.msra.mxu0 0.0
        %1390 = vmatprep.subr.mxu0 0.0
        %1391 = vmatpush1.msra.mxu0 0.0
        %1392 = vmatprep.subr.mxu0 0.0
        %1393 = vmatpush1.msra.mxu0 0.0
        %1394 = vmatprep.subr.mxu0 0.0
        %1395 = vmatpush1.msra.mxu0 0.0
        %1396 = vmatprep.subr.mxu0 0.0
        %1397 = vmatpush1.msra.mxu0 0.0
        %1398 = vmatprep.subr.mxu0 0.0
        %1399 = vmatpush1.msra.mxu0 0.0
        %1400 = vmatprep.subr.mxu0 0.0
        %1401 = vmatpush1.msra.mxu0 0.0
        %1402 = vmatprep.subr.mxu0 0.0
        %1403 = vmatpush1.msra.mxu0 0.0
        %1404 = vmatprep.subr.mxu0 0.0
        %1405 = vmatpush1.msra.mxu0 0.0
        %1406 = vmatprep.mubr.f32.mxu0 0.0
        %1407 = vmatmul.mubr.f32.gmra.mrb[0].mxu0 %v1337
        %v1408 = vpop.f32.mrb[0].mxu0
        %v1409 = vadd.f32 0.0, %v1408
        %v1410 = vpop.f32.mrb[0].mxu0
        %1411 = vmatprep.mubr.f32.mxu0 0.0
        %1412 = vmatmul.mubr.f32.gmra.mrb[0].mxu0 %v1340
        %v1413 = vpop.f32.mrb[0].mxu0
        %v1414 = vadd.f32 0.0, %v1413
        %v1415 = vpop.f32.mrb[0].mxu0
        %1416 = vdwg.mxu0
        %v1418 = vsel %vm1166, %v1251, 0
        %v1421 = vsel %vm1166, %v1252, 0
        %1423 = vmatprep.subr.mxu0 0.0
        %1424 = vmatpush1.msra.mxu0 %v785
        %1425 = vmatprep.subr.mxu0 0.0
        %1426 = vmatpush1.msra.mxu0 %v786
        %1427 = vmatprep.subr.mxu0 0.0
        %1428 = vmatpush1.msra.mxu0 %v787
        %1429 = vmatprep.subr.mxu0 0.0
        %1430 = vmatpush1.msra.mxu0 %v788
        %1431 = vmatprep.subr.mxu0 0.0
        %1432 = vmatpush1.msra.mxu0 0.0
        %1433 = vmatprep.subr.mxu0 0.0
        %1434 = vmatpush1.msra.mxu0 0.0
        %1435 = vmatprep.subr.mxu0 0.0
        %1436 = vmatpush1.msra.mxu0 0.0
        %1437 = vmatprep.subr.mxu0 0.0
        %1438 = vmatpush1.msra.mxu0 0.0
        %1439 = vmatprep.subr.mxu0 0.0
        %1440 = vmatpush1.msra.mxu0 0.0
        %1441 = vmatprep.subr.mxu0 0.0
        %1442 = vmatpush1.msra.mxu0 0.0
        %1443 = vmatprep.subr.mxu0 0.0
        %1444 = vmatpush1.msra.mxu0 0.0
        %1445 = vmatprep.subr.mxu0 0.0
        %1446 = vmatpush1.msra.mxu0 0.0
        %1447 = vmatprep.subr.mxu0 0.0
        %1448 = vmatpush1.msra.mxu0 0.0
        %1449 = vmatprep.subr.mxu0 0.0
        %1450 = vmatpush1.msra.mxu0 0.0
        %1451 = vmatprep.subr.mxu0 0.0
        %1452 = vmatpush1.msra.mxu0 0.0
        %1453 = vmatprep.subr.mxu0 0.0
        %1454 = vmatpush1.msra.mxu0 0.0
        %1455 = vmatprep.subr.mxu0 0.0
        %1456 = vmatpush1.msra.mxu0 0.0
        %1457 = vmatprep.subr.mxu0 0.0
        %1458 = vmatpush1.msra.mxu0 0.0
        %1459 = vmatprep.subr.mxu0 0.0
        %1460 = vmatpush1.msra.mxu0 0.0
        %1461 = vmatprep.subr.mxu0 0.0
        %1462 = vmatpush1.msra.mxu0 0.0
        %1463 = vmatprep.subr.mxu0 0.0
        %1464 = vmatpush1.msra.mxu0 0.0
        %1465 = vmatprep.subr.mxu0 0.0
        %1466 = vmatpush1.msra.mxu0 0.0
        %1467 = vmatprep.subr.mxu0 0.0
        %1468 = vmatpush1.msra.mxu0 0.0
        %1469 = vmatprep.subr.mxu0 0.0
        %1470 = vmatpush1.msra.mxu0 0.0
        %1471 = vmatprep.subr.mxu0 0.0
        %1472 = vmatpush1.msra.mxu0 0.0
        %1473 = vmatprep.subr.mxu0 0.0
        %1474 = vmatpush1.msra.mxu0 0.0
        %1475 = vmatprep.subr.mxu0 0.0
        %1476 = vmatpush1.msra.mxu0 0.0
        %1477 = vmatprep.subr.mxu0 0.0
        %1478 = vmatpush1.msra.mxu0 0.0
        %1479 = vmatprep.subr.mxu0 0.0
        %1480 = vmatpush1.msra.mxu0 0.0
        %1481 = vmatprep.subr.mxu0 0.0
        %1482 = vmatpush1.msra.mxu0 0.0
        %1483 = vmatprep.subr.mxu0 0.0
        %1484 = vmatpush1.msra.mxu0 0.0
        %1485 = vmatprep.subr.mxu0 0.0
        %1486 = vmatpush1.msra.mxu0 0.0
        %1487 = vmatprep.mubr.f32.mxu0 0.0
        %1488 = vmatmul.mubr.f32.gmra.mrb[0].mxu0 %v1418
        %v1489 = vpop.f32.mrb[0].mxu0
        %v1490 = vadd.f32 0.0, %v1489
        %v1491 = vpop.f32.mrb[0].mxu0
        %1492 = vmatprep.mubr.f32.mxu0 0.0
        %1493 = vmatmul.mubr.f32.gmra.mrb[0].mxu0 %v1421
        %v1494 = vpop.f32.mrb[0].mxu0
        %v1495 = vadd.f32 0.0, %v1494
        %v1496 = vpop.f32.mrb[0].mxu0
        %1497 = vdwg.mxu0
        %v1499 = vsel %vm1166, %v1253, 0
        %v1502 = vsel %vm1166, %v1254, 0
        %1504 = vmatprep.subr.mxu0 0.0
        %1505 = vmatpush1.msra.mxu0 %v789
        %1506 = vmatprep.subr.mxu0 0.0
        %1507 = vmatpush1.msra.mxu0 %v790
        %1508 = vmatprep.subr.mxu0 0.0
        %1509 = vmatpush1.msra.mxu0 %v791
        %1510 = vmatprep.subr.mxu0 0.0
        %1511 = vmatpush1.msra.mxu0 %v792
        %1512 = vmatprep.subr.mxu0 0.0
        %1513 = vmatpush1.msra.mxu0 0.0
        %1514 = vmatprep.subr.mxu0 0.0
        %1515 = vmatpush1.msra.mxu0 0.0
        %1516 = vmatprep.subr.mxu0 0.0
        %1517 = vmatpush1.msra.mxu0 0.0
        %1518 = vmatprep.subr.mxu0 0.0
        %1519 = vmatpush1.msra.mxu0 0.0
        %1520 = vmatprep.subr.mxu0 0.0
        %1521 = vmatpush1.msra.mxu0 0.0
        %1522 = vmatprep.subr.mxu0 0.0
        %1523 = vmatpush1.msra.mxu0 0.0
        %1524 = vmatprep.subr.mxu0 0.0
        %1525 = vmatpush1.msra.mxu0 0.0
        %1526 = vmatprep.subr.mxu0 0.0
        %1527 = vmatpush1.msra.mxu0 0.0
        %1528 = vmatprep.subr.mxu0 0.0
        %1529 = vmatpush1.msra.mxu0 0.0
        %1530 = vmatprep.subr.mxu0 0.0
        %1531 = vmatpush1.msra.mxu0 0.0
        %1532 = vmatprep.subr.mxu0 0.0
        %1533 = vmatpush1.msra.mxu0 0.0
        %1534 = vmatprep.subr.mxu0 0.0
        %1535 = vmatpush1.msra.mxu0 0.0
        %1536 = vmatprep.subr.mxu0 0.0
        %1537 = vmatpush1.msra.mxu0 0.0
        %1538 = vmatprep.subr.mxu0 0.0
        %1539 = vmatpush1.msra.mxu0 0.0
        %1540 = vmatprep.subr.mxu0 0.0
        %1541 = vmatpush1.msra.mxu0 0.0
        %1542 = vmatprep.subr.mxu0 0.0
        %1543 = vmatpush1.msra.mxu0 0.0
        %1544 = vmatprep.subr.mxu0 0.0
        %1545 = vmatpush1.msra.mxu0 0.0
        %1546 = vmatprep.subr.mxu0 0.0
        %1547 = vmatpush1.msra.mxu0 0.0
        %1548 = vmatprep.subr.mxu0 0.0
        %1549 = vmatpush1.msra.mxu0 0.0
        %1550 = vmatprep.subr.mxu0 0.0
        %1551 = vmatpush1.msra.mxu0 0.0
        %1552 = vmatprep.subr.mxu0 0.0
        %1553 = vmatpush1.msra.mxu0 0.0
        %1554 = vmatprep.subr.mxu0 0.0
        %1555 = vmatpush1.msra.mxu0 0.0
        %1556 = vmatprep.subr.mxu0 0.0
        %1557 = vmatpush1.msra.mxu0 0.0
        %1558 = vmatprep.subr.mxu0 0.0
        %1559 = vmatpush1.msra.mxu0 0.0
        %1560 = vmatprep.subr.mxu0 0.0
        %1561 = vmatpush1.msra.mxu0 0.0
        %1562 = vmatprep.subr.mxu0 0.0
        %1563 = vmatpush1.msra.mxu0 0.0
        %1564 = vmatprep.subr.mxu0 0.0
        %1565 = vmatpush1.msra.mxu0 0.0
        %1566 = vmatprep.subr.mxu0 0.0
        %1567 = vmatpush1.msra.mxu0 0.0
        %1568 = vmatprep.mubr.f32.mxu0 0.0
        %1569 = vmatmul.mubr.f32.gmra.mrb[0].mxu0 %v1499
        %v1570 = vpop.f32.mrb[0].mxu0
        %v1571 = vadd.f32 0.0, %v1570
        %v1572 = vpop.f32.mrb[0].mxu0
        %1573 = vmatprep.mubr.f32.mxu0 0.0
        %1574 = vmatmul.mubr.f32.gmra.mrb[0].mxu0 %v1502
        %v1575 = vpop.f32.mrb[0].mxu0
        %v1576 = vadd.f32 0.0, %v1575
        %v1577 = vpop.f32.mrb[0].mxu0
        %1578 = vdwg.mxu0
        %1579 = vst.msk [vmem:[#allocation5] sm:$0xff] %vm793, %v1328
        %1580 = vst.msk [vmem:[#allocation5 + $0x8] sm:$0xff] %vm793, %v1333
        %1583 = vrot.lane.b32.xlu0 %v1409, 8
        %v1584 = vpop.permute.xlu0 %1583
        %1585 = vrot.lane.b32.xlu0 %v1414, 8
        %v1586 = vpop.permute.xlu0 %1585
        %vm1589 = vcmask 130112
        %1590 = vst.msk [vmem:[#allocation5] sm:$0xff] %vm1589, %v1584
        %1591 = vst.msk [vmem:[#allocation5 + $0x8] sm:$0xff] %vm1589, %v1586
        %1594 = vrot.lane.b32.xlu0 %v1490, 16
        %v1595 = vpop.permute.xlu0 %1594
        %1596 = vrot.lane.b32.xlu0 %v1495, 16
        %v1597 = vpop.permute.xlu0 %1596
        %vm1600 = vcmask 195712
        %1601 = vst.msk [vmem:[#allocation5] sm:$0xff] %vm1600, %v1595
        %1602 = vst.msk [vmem:[#allocation5 + $0x8] sm:$0xff] %vm1600, %v1597
        %1605 = vrot.lane.b32.xlu0 %v1571, 24
        %v1606 = vpop.permute.xlu0 %1605
        %1607 = vrot.lane.b32.xlu0 %v1576, 24
        %v1608 = vpop.permute.xlu0 %1607
        %vm1611 = vcmask 261312
        %1612 = vst.msk [vmem:[#allocation5] sm:$0xff] %vm1611, %v1606
        %1613 = vst.msk [vmem:[#allocation5 + $0x8] sm:$0xff] %vm1611, %v1608
        %v1614 = vld [vmem:[#allocation5] sm:$0xff]
        %v1615 = vld [vmem:[#allocation5 + $0x8] sm:$0xff]
        %v1616 = vld [vmem:[#allocation6] sm:$0xff]
        %v1617 = vld [vmem:[#allocation6 + $0x8] sm:$0xff]
        %v1618 = vld [vmem:[#allocation6 + $0x10] sm:$0xff]
        %v1619 = vld [vmem:[#allocation6 + $0x18] sm:$0xff]
        %v1620 = vld [vmem:[%s4] sm:$0x1]
        %v1622 = vlaneseq
        %v1623 = vshrl.u32 %v1622, 7
        %v1624 = vsub.s32 0, %v1623
        %v1625 = vrot.slane %v1620, %v1624
        %v1628 = vsel %vm1166, %v1614, 0
        %v1631 = vsel %vm1166, %v1615, 0
        %1633 = vmatprep.subr.mxu0 0.0
        %1634 = vmatpush1.msra.mxu0 %v1616
        %1635 = vmatprep.subr.mxu0 0.0
        %1636 = vmatpush1.msra.mxu0 %v1617
        %1637 = vmatprep.subr.mxu0 0.0
        %1638 = vmatpush1.msra.mxu0 %v1618
        %1639 = vmatprep.subr.mxu0 0.0
        %1640 = vmatpush1.msra.mxu0 %v1619
        %1641 = vmatprep.subr.mxu0 0.0
        %1642 = vmatpush1.msra.mxu0 0.0
        %1643 = vmatprep.subr.mxu0 0.0
        %1644 = vmatpush1.msra.mxu0 0.0
        %1645 = vmatprep.subr.mxu0 0.0
        %1646 = vmatpush1.msra.mxu0 0.0
        %1647 = vmatprep.subr.mxu0 0.0
        %1648 = vmatpush1.msra.mxu0 0.0
        %1649 = vmatprep.subr.mxu0 0.0
        %1650 = vmatpush1.msra.mxu0 0.0
        %1651 = vmatprep.subr.mxu0 0.0
        %1652 = vmatpush1.msra.mxu0 0.0
        %1653 = vmatprep.subr.mxu0 0.0
        %1654 = vmatpush1.msra.mxu0 0.0
        %1655 = vmatprep.subr.mxu0 0.0
        %1656 = vmatpush1.msra.mxu0 0.0
        %1657 = vmatprep.subr.mxu0 0.0
        %1658 = vmatpush1.msra.mxu0 0.0
        %1659 = vmatprep.subr.mxu0 0.0
        %1660 = vmatpush1.msra.mxu0 0.0
        %1661 = vmatprep.subr.mxu0 0.0
        %1662 = vmatpush1.msra.mxu0 0.0
        %1663 = vmatprep.subr.mxu0 0.0
        %1664 = vmatpush1.msra.mxu0 0.0
        %1665 = vmatprep.subr.mxu0 0.0
        %1666 = vmatpush1.msra.mxu0 0.0
        %1667 = vmatprep.subr.mxu0 0.0
        %1668 = vmatpush1.msra.mxu0 0.0
        %1669 = vmatprep.subr.mxu0 0.0
        %1670 = vmatpush1.msra.mxu0 0.0
        %1671 = vmatprep.subr.mxu0 0.0
        %1672 = vmatpush1.msra.mxu0 0.0
        %1673 = vmatprep.subr.mxu0 0.0
        %1674 = vmatpush1.msra.mxu0 0.0
        %1675 = vmatprep.subr.mxu0 0.0
        %1676 = vmatpush1.msra.mxu0 0.0
        %1677 = vmatprep.subr.mxu0 0.0
        %1678 = vmatpush1.msra.mxu0 0.0
        %1679 = vmatprep.subr.mxu0 0.0
        %1680 = vmatpush1.msra.mxu0 0.0
        %1681 = vmatprep.subr.mxu0 0.0
        %1682 = vmatpush1.msra.mxu0 0.0
        %1683 = vmatprep.subr.mxu0 0.0
        %1684 = vmatpush1.msra.mxu0 0.0
        %1685 = vmatprep.subr.mxu0 0.0
        %1686 = vmatpush1.msra.mxu0 0.0
        %1687 = vmatprep.subr.mxu0 0.0
        %1688 = vmatpush1.msra.mxu0 0.0
        %1689 = vmatprep.subr.mxu0 0.0
        %1690 = vmatpush1.msra.mxu0 0.0
        %1691 = vmatprep.subr.mxu0 0.0
        %1692 = vmatpush1.msra.mxu0 0.0
        %1693 = vmatprep.subr.mxu0 0.0
        %1694 = vmatpush1.msra.mxu0 0.0
        %1695 = vmatprep.subr.mxu0 0.0
        %1696 = vmatpush1.msra.mxu0 0.0
        %1697 = vmatprep.mubr.f32.mxu0 0.0
        %1698 = vmatmul.mubr.f32.gmra.mrb[0].mxu0 %v1628
        %v1699 = vpop.f32.mrb[0].mxu0
        %v1700 = vadd.f32 %v1625, %v1699
        %v1701 = vpop.f32.mrb[0].mxu0
        %1702 = vmatprep.mubr.f32.mxu0 0.0
        %1703 = vmatmul.mubr.f32.gmra.mrb[0].mxu0 %v1631
        %v1704 = vpop.f32.mrb[0].mxu0
        %v1705 = vadd.f32 %v1625, %v1704
        %v1706 = vpop.f32.mrb[0].mxu0
        %1707 = vdwg.mxu0
        %v1708 = vadd.f32 %v750, %v1700
        %v1709 = vadd.f32 %v751, %v1705
        %v1710 = vld [vmem:[%s7] sm:$0x1]
        %v1711 = vld [vmem:[%s8] sm:$0x1]
        %v1712 = vsel %vm1166, %v1708, 0.0
        %1713 = vadd.xlane.f32.xlu0 %v1712
        %v1714 = vpop.xlane.xlu0 %1713
        %v1715 = vsel %vm1166, %v1709, 0.0
        %1716 = vadd.xlane.f32.xlu0 %v1715
        %v1717 = vpop.xlane.xlu0 %1716
        %v1718 = vrcp.pop 32.0
        %v1719 = vmul.f32 %v1714, %v1718
        %v1720 = vmul.f32 %v1717, %v1718
        %v1721 = vsub.f32 %v1708, %v1719
        %v1722 = vsub.f32 %v1709, %v1720
        %v1723 = vmul.f32 %v1721, %v1721
        %v1724 = vmul.f32 %v1722, %v1722
        %v1725 = vsel %vm1166, %v1723, 0.0
        %1726 = vadd.xlane.f32.xlu0 %v1725
        %v1727 = vpop.xlane.xlu0 %1726
        %v1728 = vsel %vm1166, %v1724, 0.0
        %1729 = vadd.xlane.f32.xlu0 %v1728
        %v1730 = vpop.xlane.xlu0 %1729
        %v1731 = vmul.f32 %v1727, %v1718
        %v1732 = vmul.f32 %v1730, %v1718
        %v1733 = vadd.f32 %v1731, 1e-05
        %v1734 = vadd.f32 %v1732, 1e-05
        %v1735 = vrsqrt.pop %v1733
        %v1736 = vrsqrt.pop %v1734
        %v1737 = vmul.f32 %v1721, %v1735
        %v1738 = vmul.f32 %v1722, %v1736
        %v1740 = vlaneseq
        %v1741 = vshrl.u32 %v1740, 7
        %v1742 = vsub.s32 0, %v1741
        %v1743 = vrot.slane %v1710, %v1742
        %v1745 = vmul.f32 %v1737, %v1743
        %v1746 = vmul.f32 %v1738, %v1743
        %v1748 = vlaneseq
        %v1749 = vshrl.u32 %v1748, 7
        %v1750 = vsub.s32 0, %v1749
        %v1751 = vrot.slane %v1711, %v1750
        %v1753 = vadd.f32 %v1745, %v1751
        %v1754 = vadd.f32 %v1746, %v1751
        %v1755 = vld [vmem:[#allocation9] sm:$0xff]
        %v1756 = vld [vmem:[#allocation9 + $0x8] sm:$0xff]
        %v1757 = vld [vmem:[#allocation9 + $0x10] sm:$0xff]
        %v1758 = vld [vmem:[#allocation9 + $0x18] sm:$0xff]
        %v1759 = vld [vmem:[%s10] sm:$0x1]
        %v1761 = vlaneseq
        %v1762 = vshrl.u32 %v1761, 7
        %v1763 = vsub.s32 0, %v1762
        %v1764 = vrot.slane %v1759, %v1763
        %v1767 = vsel %vm1166, %v1753, 0
        %v1770 = vsel %vm1166, %v1754, 0
        %1772 = vmatprep.subr.mxu0 0.0
        %1773 = vmatpush1.msra.mxu0 %v1755
        %1774 = vmatprep.subr.mxu0 0.0
        %1775 = vmatpush1.msra.mxu0 %v1756
        %1776 = vmatprep.subr.mxu0 0.0
        %1777 = vmatpush1.msra.mxu0 %v1757
        %1778 = vmatprep.subr.mxu0 0.0
        %1779 = vmatpush1.msra.mxu0 %v1758
        %1780 = vmatprep.subr.mxu0 0.0
        %1781 = vmatpush1.msra.mxu0 0.0
        %1782 = vmatprep.subr.mxu0 0.0
        %1783 = vmatpush1.msra.mxu0 0.0
        %1784 = vmatprep.subr.mxu0 0.0
        %1785 = vmatpush1.msra.mxu0 0.0
        %1786 = vmatprep.subr.mxu0 0.0
        %1787 = vmatpush1.msra.mxu0 0.0
        %1788 = vmatprep.subr.mxu0 0.0
        %1789 = vmatpush1.msra.mxu0 0.0
        %1790 = vmatprep.subr.mxu0 0.0
        %1791 = vmatpush1.msra.mxu0 0.0
        %1792 = vmatprep.subr.mxu0 0.0
        %1793 = vmatpush1.msra.mxu0 0.0
        %1794 = vmatprep.subr.mxu0 0.0
        %1795 = vmatpush1.msra.mxu0 0.0
        %1796 = vmatprep.subr.mxu0 0.0
        %1797 = vmatpush1.msra.mxu0 0.0
        %1798 = vmatprep.subr.mxu0 0.0
        %1799 = vmatpush1.msra.mxu0 0.0
        %1800 = vmatprep.subr.mxu0 0.0
        %1801 = vmatpush1.msra.mxu0 0.0
        %1802 = vmatprep.subr.mxu0 0.0
        %1803 = vmatpush1.msra.mxu0 0.0
        %1804 = vmatprep.subr.mxu0 0.0
        %1805 = vmatpush1.msra.mxu0 0.0
        %1806 = vmatprep.subr.mxu0 0.0
        %1807 = vmatpush1.msra.mxu0 0.0
        %1808 = vmatprep.subr.mxu0 0.0
        %1809 = vmatpush1.msra.mxu0 0.0
        %1810 = vmatprep.subr.mxu0 0.0
        %1811 = vmatpush1.msra.mxu0 0.0
        %1812 = vmatprep.subr.mxu0 0.0
        %1813 = vmatpush1.msra.mxu0 0.0
        %1814 = vmatprep.subr.mxu0 0.0
        %1815 = vmatpush1.msra.mxu0 0.0
        %1816 = vmatprep.subr.mxu0 0.0
        %1817 = vmatpush1.msra.mxu0 0.0
        %1818 = vmatprep.subr.mxu0 0.0
        %1819 = vmatpush1.msra.mxu0 0.0
        %1820 = vmatprep.subr.mxu0 0.0
        %1821 = vmatpush1.msra.mxu0 0.0
        %1822 = vmatprep.subr.mxu0 0.0
        %1823 = vmatpush1.msra.mxu0 0.0
        %1824 = vmatprep.subr.mxu0 0.0
        %1825 = vmatpush1.msra.mxu0 0.0
        %1826 = vmatprep.subr.mxu0 0.0
        %1827 = vmatpush1.msra.mxu0 0.0
        %1828 = vmatprep.subr.mxu0 0.0
        %1829 = vmatpush1.msra.mxu0 0.0
        %1830 = vmatprep.subr.mxu0 0.0
        %1831 = vmatpush1.msra.mxu0 0.0
        %1832 = vmatprep.subr.mxu0 0.0
        %1833 = vmatpush1.msra.mxu0 0.0
        %1834 = vmatprep.subr.mxu0 0.0
        %1835 = vmatpush1.msra.mxu0 0.0
        %1836 = vmatprep.mubr.f32.mxu0 0.0
        %1837 = vmatmul.mubr.f32.gmra.mrb[0].mxu0 %v1767
        %v1838 = vpop.f32.mrb[0].mxu0
        %v1839 = vadd.f32 %v1764, %v1838
        %v1840 = vpop.f32.mrb[0].mxu0
        %1841 = vmatprep.mubr.f32.mxu0 0.0
        %1842 = vmatmul.mubr.f32.gmra.mrb[0].mxu0 %v1770
        %v1843 = vpop.f32.mrb[0].mxu0
        %v1844 = vadd.f32 %v1764, %v1843
        %v1845 = vpop.f32.mrb[0].mxu0
        %1846 = vdwg.mxu0
        %v1847 = vmax.f32 %v1839, 0.0
        %v1848 = vmax.f32 %v1844, 0.0
        %v1849 = vld [vmem:[%s11] sm:$0xff]
        %v1850 = vld [vmem:[%s11 + $0x8] sm:$0xff]
        %v1851 = vld [vmem:[%s11 + $0x10] sm:$0xff]
        %v1852 = vld [vmem:[%s11 + $0x18] sm:$0xff]
        %v1853 = vld [vmem:[%s11 + $0x20] sm:$0xff]
        %v1854 = vld [vmem:[%s11 + $0x28] sm:$0xff]
        %v1855 = vld [vmem:[%s11 + $0x30] sm:$0xff]
        %v1856 = vld [vmem:[%s11 + $0x38] sm:$0xff]
        %v1857 = vld [vmem:[%s12] sm:$0x1]
        %v1859 = vlaneseq
        %v1860 = vshrl.u32 %v1859, 7
        %v1861 = vsub.s32 0, %v1860
        %v1862 = vrot.slane %v1857, %v1861
        %vm1864 = vcmask 523264
        %v1866 = vsel %vm1864, %v1847, 0
        %v1869 = vsel %vm1864, %v1848, 0
        %1871 = vmatprep.subr.mxu0 0.0
        %1872 = vmatpush1.msra.mxu0 %v1849
        %1873 = vmatprep.subr.mxu0 0.0
        %1874 = vmatpush1.msra.mxu0 %v1850
        %1875 = vmatprep.subr.mxu0 0.0
        %1876 = vmatpush1.msra.mxu0 %v1851
        %1877 = vmatprep.subr.mxu0 0.0
        %1878 = vmatpush1.msra.mxu0 %v1852
        %1879 = vmatprep.subr.mxu0 0.0
        %1880 = vmatpush1.msra.mxu0 %v1853
        %1881 = vmatprep.subr.mxu0 0.0
        %1882 = vmatpush1.msra.mxu0 %v1854
        %1883 = vmatprep.subr.mxu0 0.0
        %1884 = vmatpush1.msra.mxu0 %v1855
        %1885 = vmatprep.subr.mxu0 0.0
        %1886 = vmatpush1.msra.mxu0 %v1856
        %1887 = vmatprep.subr.mxu0 0.0
        %1888 = vmatpush1.msra.mxu0 0.0
        %1889 = vmatprep.subr.mxu0 0.0
        %1890 = vmatpush1.msra.mxu0 0.0
        %1891 = vmatprep.subr.mxu0 0.0
        %1892 = vmatpush1.msra.mxu0 0.0
        %1893 = vmatprep.subr.mxu0 0.0
        %1894 = vmatpush1.msra.mxu0 0.0
        %1895 = vmatprep.subr.mxu0 0.0
        %1896 = vmatpush1.msra.mxu0 0.0
        %1897 = vmatprep.subr.mxu0 0.0
        %1898 = vmatpush1.msra.mxu0 0.0
        %1899 = vmatprep.subr.mxu0 0.0
        %1900 = vmatpush1.msra.mxu0 0.0
        %1901 = vmatprep.subr.mxu0 0.0
        %1902 = vmatpush1.msra.mxu0 0.0
        %1903 = vmatprep.subr.mxu0 0.0
        %1904 = vmatpush1.msra.mxu0 0.0
        %1905 = vmatprep.subr.mxu0 0.0
        %1906 = vmatpush1.msra.mxu0 0.0
        %1907 = vmatprep.subr.mxu0 0.0
        %1908 = vmatpush1.msra.mxu0 0.0
        %1909 = vmatprep.subr.mxu0 0.0
        %1910 = vmatpush1.msra.mxu0 0.0
        %1911 = vmatprep.subr.mxu0 0.0
        %1912 = vmatpush1.msra.mxu0 0.0
        %1913 = vmatprep.subr.mxu0 0.0
        %1914 = vmatpush1.msra.mxu0 0.0
        %1915 = vmatprep.subr.mxu0 0.0
        %1916 = vmatpush1.msra.mxu0 0.0
        %1917 = vmatprep.subr.mxu0 0.0
        %1918 = vmatpush1.msra.mxu0 0.0
        %1919 = vmatprep.subr.mxu0 0.0
        %1920 = vmatpush1.msra.mxu0 0.0
        %1921 = vmatprep.subr.mxu0 0.0
        %1922 = vmatpush1.msra.mxu0 0.0
        %1923 = vmatprep.subr.mxu0 0.0
        %1924 = vmatpush1.msra.mxu0 0.0
        %1925 = vmatprep.subr.mxu0 0.0
        %1926 = vmatpush1.msra.mxu0 0.0
        %1927 = vmatprep.subr.mxu0 0.0
        %1928 = vmatpush1.msra.mxu0 0.0
        %1929 = vmatprep.subr.mxu0 0.0
        %1930 = vmatpush1.msra.mxu0 0.0
        %1931 = vmatprep.subr.mxu0 0.0
        %1932 = vmatpush1.msra.mxu0 0.0
        %1933 = vmatprep.subr.mxu0 0.0
        %1934 = vmatpush1.msra.mxu0 0.0
        %1935 = vmatprep.mubr.f32.mxu0 0.0
        %1936 = vmatmul.mubr.f32.gmra.mrb[0].mxu0 %v1866
        %v1937 = vpop.f32.mrb[0].mxu0
        %v1938 = vadd.f32 %v1862, %v1937
        %v1939 = vpop.f32.mrb[0].mxu0
        %1940 = vmatprep.mubr.f32.mxu0 0.0
        %1941 = vmatmul.mubr.f32.gmra.mrb[0].mxu0 %v1869
        %v1942 = vpop.f32.mrb[0].mxu0
        %v1943 = vadd.f32 %v1862, %v1942
        %v1944 = vpop.f32.mrb[0].mxu0
        %1945 = vdwg.mxu0
        %v1946 = vadd.f32 %v1708, %v1938
        %v1947 = vadd.f32 %v1709, %v1943
        %1948 = vst.msk [vmem:[%s477] sm:$0xff] %vm1166, %v1946
        %1949 = vst.msk [vmem:[%s477 + $0x8] sm:$0xff] %vm1166, %v1947
        %s1950 = sand.u32 %s329, 1
        %s1951 = scalar_lea.sflag [#allocation8], %s1950
        %s1952 = sand.u32 %s329, 1
        %s1953 = smul.addr %s1952, 16
        %s1954 = scalar_lea.vmem [#allocation11], %s1953
        // Predicated region
        $region92: #{tpu_custom_call.1} parent=71 // pred_check
          %p1955 = pneg %p339
        $region93: #{tpu_custom_call.1} parent=71 // pred_check_branch
          %1957 = sbr.rel (%p1955) target = $region95
        $region94: #{tpu_custom_call.1} parent=71 // pred_region
          %s1958 = smul.u32 2, %s34
          %s1960 = ssub.s32 256, 256
          %1961 = vsyncadd %s1951, %s1960
          %s1962 = smul.addr %s33, 4
          %s1963 = sadd.s32 %s1958, %s1962
          %s1964 = smul.addr %s1963, 128
          %s1965 = scalar_lea.hbm %s13, %s1964
          %s1966 = sshll.u32 %s1954, 4
          %s1967 = int_to_ptr.vmem [resolvable:$true] %s1966
          %1972 = dma.vmem_to_hbm [thread:$0]  %s1967, 256, %s1965, %s1951, 128, 128, 8
        $region95: #{tpu_custom_call.1} parent=71 // pred_fallthru
          _
      $region72: #{tpu_custom_call.1} parent=5 // pred_fallthru
        _
      %p1973 = scmp.le.s32.totalorder 2, %s24
      // Predicated region
      $region96: #{tpu_custom_call.1} parent=5 // pred_check
        %p1974 = pneg %p1973
      $region97: #{tpu_custom_call.1} parent=5 // pred_check_branch
        %1976 = sbr.rel (%p1974) target = $region99
      $region98: #{tpu_custom_call.1} parent=5 // pred_region
        %s1977 = ssub.s32 %s24, 2
        // Predicated region
        $region100: #{tpu_custom_call.1} parent=98 // pred_check
          %p1978 = pneg %p345
        $region101: #{tpu_custom_call.1} parent=98 // pred_check_branch
          %1980 = sbr.rel (%p1978) target = $region103
        $region102: #{tpu_custom_call.1} parent=98 // pred_region
          %s1981 = sand.u32 %s330, 1
          %s1982 = scalar_lea.sflag [#allocation8], %s1981
          %s1983 = sand.u32 %s330, 1
          %s1984 = smul.addr %s1983, 16
          %s1985 = scalar_lea.vmem [#allocation11], %s1984
          %1986 = dma.done %s1982, 256
        $region103: #{tpu_custom_call.1} parent=98 // pred_fallthru
          _
      $region99: #{tpu_custom_call.1} parent=5 // pred_fallthru
        _
    $region6: #{tpu_custom_call.1} parent=1 // loop_footer
      %s28 = sadd.s32 1, %s24
    $region7: #{tpu_custom_call.1} parent=1 // loop_footer_branch
      %23 = sbr.rel target = $region3
    $region8: #{tpu_custom_call.1} parent=1 // loop_exit
      _
    %1987 = vsyncpa [#allocation7], 1
    %s1988 = scalar_lea.sflag [#allocation7], 1
    %1989 = vsyncpa %s1988, 1
    %1990 = vsyncpa [#allocation10], 1
    %1991 = vsyncpa [#allocation8], 1
    %s1992 = scalar_lea.sflag [#allocation8], 1
    %1993 = vsyncpa %s1992, 1

</llo_original>
